<compile_context>
chip_gen: v5e
topology: v5e:2x2
jax: 0.10.0
libtpu: 0.0.40
codegen_flags: <defaults>
</compile_context>

<pallas_src>
import functools

import jax
import jax.numpy as jnp
import numpy as np
from jax.experimental import pallas as pl
from jax.experimental.pallas import tpu as pltpu


def _round_up(x, m):
    return ((x + m - 1) // m) * m


def _device_kind():
    try:
        return jax.devices()[0].device_kind.lower()
    except Exception:
        return ""


def _num_tensorcores():
    # Only v7x has 2 TensorCores per chip; v5e/v6e have 1, so splitting a small
    # batch into >=2 grid steps there is pure pipeline overhead.
    return 2 if "v7" in _device_kind() else 1


def _vmem_budget_bytes():
    # Stay inside each generation's *default* scoped-VMEM limit with margin
    # (v5e: 16 MiB scoped default, v6e/v7x: 32 MiB; v7x physical VMEM is 64 MiB).
    return (12 if "v5" in _device_kind() else 24) * 1024 * 1024


# -----------------------------------------------------------------------------
# Kernel body: y = relu(relu(x @ W1 + b1) @ W2 + b2) @ W3 + b3
# (shapes may be row-packed; the math is identical).
# -----------------------------------------------------------------------------
def _mlp_kernel(x_ref, w1_ref, b1_ref, w2_ref, b2_ref, w3_ref, b3_ref, o_ref):
    # Matmuls accumulate in f32 on the MXU; bias-add / ReLU stay in f32 on the
    # VPU; intermediates are cast back to the weight dtype so layers 2/3 also
    # run at the MXU's native (bf16) rate.  Output cast once at the end.
    h = jnp.dot(x_ref[...], w1_ref[...], preferred_element_type=jnp.float32)
    h = jnp.maximum(h + b1_ref[...], 0.0).astype(w2_ref.dtype)
    h = jnp.dot(h, w2_ref[...], preferred_element_type=jnp.float32)
    h = jnp.maximum(h + b2_ref[...], 0.0).astype(w3_ref.dtype)
    y = jnp.dot(h, w3_ref[...], preferred_element_type=jnp.float32)
    o_ref[...] = (y + b3_ref[...]).astype(o_ref.dtype)


# -----------------------------------------------------------------------------
# One-time parameter prep (outside jit): block-diagonal row-packed weights.
# -----------------------------------------------------------------------------
def choose_pack(input_size, hidden_sizes, output_size,
                compute_dtype=jnp.bfloat16, max_pack=16,
                weight_vmem_budget=8 * 1024 * 1024):
    """Rows packed per lane group.  Replicated block-diagonal weights grow
    ~pack^2, so clamp pack to keep them a small fraction of VMEM."""
    itemsize = jnp.dtype(compute_dtype).itemsize
    sizes = [input_size, *hidden_sizes, output_size]

    def packed_weight_bytes(p):
        return sum((p * a) * (p * b) * itemsize
                   for a, b in zip(sizes[:-1], sizes[1:]))

    pack = max(1, int(max_pack))
    while pack > 1 and packed_weight_bytes(pack) > weight_vmem_budget:
        pack //= 2
    return pack


def pack_mlp_params(params, pack, compute_dtype=jnp.bfloat16):
    """Build block-diagonal replicated weights (compute_dtype) and P-tiled f32
    biases.  Call once outside the jitted forward (no per-call cast traffic)."""
    eye = jnp.eye(pack, dtype=jnp.float32)
    packed = []
    for w, b in params:
        wp = jnp.kron(eye, w.astype(jnp.float32)).astype(compute_dtype)
        bp = jnp.tile(b.reshape(1, -1), (1, pack)).astype(jnp.float32)
        packed.append((wp, bp))
    return packed


# -----------------------------------------------------------------------------
# Fused forward
# -----------------------------------------------------------------------------
@functools.partial(jax.jit, static_argnames=("pack", "block_rows"))
def mlp_forward(x, w1p, b1p, w2p, b2p, w3p, b3p, *, pack, block_rows=512):
    """y = relu(relu(x @ W1 + b1) @ W2 + b2) @ W3 + b3 on row-packed params.

    x: [B, input_size].  w*p: [pack*in, pack*out] block-diagonal, b*p:
    [1, pack*out] (from pack_mlp_params).  block_rows counts *packed* rows,
    i.e. block_rows * pack original batch rows per grid step.
    """
    B, in_sz = x.shape
    out_dtype = x.dtype
    compute_dtype = w1p.dtype
    Kp = w1p.shape[0]
    Np = w3p.shape[1]
    if Kp != pack * in_sz:
        raise ValueError(f"w1p K dim {Kp} != pack * input_size {pack * in_sz}")
    out_sz = Np // pack

    # Sub-32-bit dtypes pack along sublanes: bf16 native tile is (16, 128).
    sublane = {4: 8, 2: 16, 1: 32}.get(jnp.dtype(compute_dtype).itemsize, 8)

    # Pad the batch so the packed row count is sublane aligned; padded rows
    # compute garbage that is sliced away below.
    row_quantum = pack * sublane
    B_pad = _round_up(B, row_quantum)
    if B_pad != B:
        x = jnp.pad(x, ((0, B_pad - B), (0, 0)))
    R = B_pad // pack
    xp = x.astype(compute_dtype).reshape(R, Kp)    # row-major -> free reshape

    # ---- batch-tile sizing ---------------------------------------------------
    block_rows = max(sublane, _round_up(min(int(block_rows), R), sublane))
    # Split into >=2 grid steps only where it can shard across TensorCores (v7x).
    if _num_tensorcores() >= 2 and R >= 2 * sublane:
        block_rows = min(block_rows, _round_up(pl.cdiv(R, 2), sublane))

    weight_bytes = sum(int(a.size) * a.dtype.itemsize
                       for a in (w1p, b1p, w2p, b2p, w3p, b3p))
    budget = _vmem_budget_bytes()
    if 2 * weight_bytes > budget:
        # NOTE: for much larger hidden sizes, switch to a K/N reduction grid
        # axis with an f32 VMEM accumulator (P3) instead of pinning full blocks.
        raise ValueError("pinned packed weights exceed the VMEM budget; "
                         "lower `pack` or use a K/N-tiled accumulator layout")

    x_item = jnp.dtype(compute_dtype).itemsize
    o_item = jnp.dtype(out_dtype).itemsize

    def vmem_bytes(br):
        return (2 * br * Kp * x_item       # double-buffered x tiles
                + 2 * br * Np * o_item     # double-buffered out tiles
                + 2 * weight_bytes)        # pinned weight / bias blocks

    while block_rows > sublane and vmem_bytes(block_rows) > budget:
        block_rows = max(sublane, _round_up(block_rows // 2, sublane))

    grid = (pl.cdiv(R, block_rows),)

    out = pl.pallas_call(
        _mlp_kernel,
        out_shape=jax.ShapeDtypeStruct((R, Np), out_dtype),
        grid_spec=pltpu.PrefetchScalarGridSpec(
            num_scalar_prefetch=0,
            grid=grid,
            in_specs=[
                pl.BlockSpec((block_rows, Kp), lambda i: (i, 0)),   # x tile
                pl.BlockSpec(w1p.shape, lambda i: (0, 0)),          # W1 (pinned)
                pl.BlockSpec(b1p.shape, lambda i: (0, 0)),          # b1
                pl.BlockSpec(w2p.shape, lambda i: (0, 0)),          # W2
                pl.BlockSpec(b2p.shape, lambda i: (0, 0)),          # b2
                pl.BlockSpec(w3p.shape, lambda i: (0, 0)),          # W3
                pl.BlockSpec(b3p.shape, lambda i: (0, 0)),          # b3
            ],
            out_specs=pl.BlockSpec((block_rows, Np), lambda i: (i, 0)),
        ),
        compiler_params=pltpu.CompilerParams(
            dimension_semantics=("parallel",)),
    )(xp, w1p, b1p, w2p, b2p, w3p, b3p)

    y = out.reshape(B_pad, out_sz)                  # free unpack of lane groups
    return y[:B] if B_pad != B else y


# -----------------------------------------------------------------------------
# Parameter init matching the PyTorch module (xavier_uniform weights, zero bias)
# -----------------------------------------------------------------------------
def xavier_uniform(key, in_features, out_features, dtype=jnp.float32):
    bound = float(np.sqrt(6.0 / (in_features + out_features)))
    # Stored [in, out] (transposed vs. PyTorch [out, in]); the symmetric uniform
    # distribution makes the init statistics identical.
    return jax.random.uniform(key, (in_features, out_features), dtype=dtype,
                              minval=-bound, maxval=bound)


def make_mlp_params(key, input_size, hidden_sizes, output_size,
                    zero_init_last_fc=False):
    sizes = [input_size, *hidden_sizes, output_size]
    keys = jax.random.split(key, len(sizes) - 1)
    params = []
    for li, (fin, fout) in enumerate(zip(sizes[:-1], sizes[1:])):
        params.append((xavier_uniform(keys[li], fin, fout),
                       jnp.zeros((1, fout), jnp.float32)))
    if zero_init_last_fc:
        w_last, b_last = params[-1]
        params[-1] = (jnp.zeros_like(w_last), jnp.zeros_like(b_last))
    return params


# -----------------------------------------------------------------------------
# References (numpy float64: no XLA matmul-precision ambiguity in the baseline)
# -----------------------------------------------------------------------------
def mlp_reference_np(x, params):
    h = np.asarray(x, np.float64)
    for li, (w, b) in enumerate(params):
        h = h @ np.asarray(w, np.float64) + np.asarray(b, np.float64)
        if li < len(params) - 1:
            h = np.maximum(h, 0.0)
    return h


def _quant_bf16(a):
    # bf16 round-trip (what the kernel's bf16 path sees), returned as float64.
    return np.asarray(jnp.asarray(a).astype(jnp.bfloat16).astype(jnp.float32),
                      dtype=np.float64)


def mlp_reference_np_bf16(x, params):
    """Mirrors the kernel's bf16 path (bf16 operands/intermediates, exact
    accumulate, f32 bias+ReLU) so the comparison isolates kernel bugs from
    expected bf16 quantization error."""
    h = _quant_bf16(x)
    for li, (w, b) in enumerate(params):
        h = h @ _quant_bf16(w) + np.asarray(b, np.float64)
        if li < len(params) - 1:
            h = _quant_bf16(np.maximum(h, 0.0))
    return h


if __name__ == "__main__":
    # Module config: MLP(input_size=16, output_size=8, hidden_sizes=(32, 32)).
    input_size, output_size = 16, 8
    hidden_sizes = (32, 32)
    batch = 200            # deliberately NOT a multiple of the row pack

    key = jax.random.PRNGKey(0)
    k_x, k_p = jax.random.split(key)
    x = jax.random.normal(k_x, (batch, input_size), dtype=jnp.float32)
    params = make_mlp_params(k_p, input_size, hidden_sizes, output_size,
                             zero_init_last_fc=False)
    np_params = [(np.asarray(w), np.asarray(b)) for w, b in params]
    ref_f64 = mlp_reference_np(np.asarray(x), np_params)

    # ---- default path: bf16 MXU compute, P=16 row packing (128-lane output) --
    pack_bf = choose_pack(input_size, hidden_sizes, output_size, jnp.bfloat16)
    (w1p, b1p), (w2p, b2p), (w3p, b3p) = pack_mlp_params(params, pack_bf,
                                                         jnp.bfloat16)
    out_bf16 = jax.block_until_ready(
        mlp_forward(x, w1p, b1p, w2p, b2p, w3p, b3p, pack=pack_bf))
    assert out_bf16.shape == (batch, output_size)
    ref_bf16 = mlp_reference_np_bf16(np.asarray(x), np_params)
    np.testing.assert_allclose(np.asarray(out_bf16, np.float64), ref_bf16,
                               rtol=1e-2, atol=1e-2)

    # ---- f32 path (P=8), small forced tile: exercises a multi-step grid with
    #      pinned weights plus the padded (B % pack != 0) trailing rows --------
    pack_f32 = 8
    (w1q, b1q), (w2q, b2q), (w3q, b3q) = pack_mlp_params(params, pack_f32,
                                                         jnp.float32)
    out_f32 = jax.block_until_ready(
        mlp_forward(x, w1q, b1q, w2q, b2q, w3q, b3q, pack=pack_f32,
                    block_rows=16))
    assert out_f32.shape == (batch, output_size)
    np.testing.assert_allclose(np.asarray(out_f32, np.float64), ref_f64,
                               rtol=2e-2, atol=2e-2)

    print("KERNEL_OK")
</pallas_src>

<mosaic_0001>
module attributes {stable_mosaic.version = 11 : i64} {
  func.func @_mlp_kernel(%arg0: i32, %arg1: memref<16x256xbf16, #tpu.memory_space<vmem>>, %arg2: memref<256x512xbf16, #tpu.memory_space<vmem>>, %arg3: memref<1x512xf32, #tpu.memory_space<vmem>>, %arg4: memref<512x512xbf16, #tpu.memory_space<vmem>>, %arg5: memref<1x512xf32, #tpu.memory_space<vmem>>, %arg6: memref<512x128xbf16, #tpu.memory_space<vmem>>, %arg7: memref<1x128xf32, #tpu.memory_space<vmem>>, %arg8: memref<16x128xf32, #tpu.memory_space<vmem>>) attributes {dimension_semantics = [#tpu.dimension_semantics<parallel>], iteration_bounds = array<i64: 1>, scalar_prefetch = 0 : i64, scratch_operands = 0 : i64, tpu.core_type = #tpu.core_type<tc>, window_params = [{transform_indices = @transform_0, window_bounds = array<i64: 16, 256>}, {pipeline_mode = #tpu.pipeline_mode<synchronous>, transform_indices = @transform_1, window_bounds = array<i64: 256, 512>}, {pipeline_mode = #tpu.pipeline_mode<synchronous>, transform_indices = @transform_2, window_bounds = array<i64: 1, 512>}, {pipeline_mode = #tpu.pipeline_mode<synchronous>, transform_indices = @transform_3, window_bounds = array<i64: 512, 512>}, {pipeline_mode = #tpu.pipeline_mode<synchronous>, transform_indices = @transform_4, window_bounds = array<i64: 1, 512>}, {pipeline_mode = #tpu.pipeline_mode<synchronous>, transform_indices = @transform_5, window_bounds = array<i64: 512, 128>}, {pipeline_mode = #tpu.pipeline_mode<synchronous>, transform_indices = @transform_6, window_bounds = array<i64: 1, 128>}, {transform_indices = @transform_7, window_bounds = array<i64: 16, 128>}]} {
    %c0 = arith.constant 0 : index
    %c0_0 = arith.constant 0 : index
    %0 = vector.load %arg1[%c0, %c0_0] : memref<16x256xbf16, #tpu.memory_space<vmem>>, vector<16x256xbf16>
    %c0_1 = arith.constant 0 : index
    %c0_2 = arith.constant 0 : index
    %1 = vector.load %arg2[%c0_1, %c0_2] : memref<256x512xbf16, #tpu.memory_space<vmem>>, vector<256x512xbf16>
    %cst = arith.constant dense<0.000000e+00> : vector<16x512xf32>
    %2 = tpu.matmul %0, %1, %cst {dimension_numbers = #tpu.dot_dimension_numbers<[1], [0], [0], [1], [0, 0, 1, 1], [], []>} : vector<16x256xbf16>, vector<256x512xbf16>, vector<16x512xf32> -> vector<16x512xf32>
    %c0_3 = arith.constant 0 : index
    %c0_4 = arith.constant 0 : index
    %3 = vector.load %arg3[%c0_3, %c0_4] : memref<1x512xf32, #tpu.memory_space<vmem>>, vector<1x512xf32>
    %4 = vector.broadcast %3 : vector<1x512xf32> to vector<16x512xf32>
    %5 = arith.addf %2, %4 : vector<16x512xf32>
    %cst_5 = arith.constant 0.000000e+00 : f32
    %6 = vector.broadcast %cst_5 : f32 to vector<16x512xf32>
    %7 = arith.maximumf %5, %6 : vector<16x512xf32>
    %8 = arith.truncf %7 : vector<16x512xf32> to vector<16x512xbf16>
    %c0_6 = arith.constant 0 : index
    %c0_7 = arith.constant 0 : index
    %9 = vector.load %arg4[%c0_6, %c0_7] : memref<512x512xbf16, #tpu.memory_space<vmem>>, vector<512x512xbf16>
    %cst_8 = arith.constant dense<0.000000e+00> : vector<16x512xf32>
    %10 = tpu.matmul %8, %9, %cst_8 {dimension_numbers = #tpu.dot_dimension_numbers<[1], [0], [0], [1], [0, 0, 1, 1], [], []>} : vector<16x512xbf16>, vector<512x512xbf16>, vector<16x512xf32> -> vector<16x512xf32>
    %c0_9 = arith.constant 0 : index
    %c0_10 = arith.constant 0 : index
    %11 = vector.load %arg5[%c0_9, %c0_10] : memref<1x512xf32, #tpu.memory_space<vmem>>, vector<1x512xf32>
    %12 = vector.broadcast %11 : vector<1x512xf32> to vector<16x512xf32>
    %13 = arith.addf %10, %12 : vector<16x512xf32>
    %cst_11 = arith.constant 0.000000e+00 : f32
    %14 = vector.broadcast %cst_11 : f32 to vector<16x512xf32>
    %15 = arith.maximumf %13, %14 : vector<16x512xf32>
    %16 = arith.truncf %15 : vector<16x512xf32> to vector<16x512xbf16>
    %c0_12 = arith.constant 0 : index
    %c0_13 = arith.constant 0 : index
    %17 = vector.load %arg6[%c0_12, %c0_13] : memref<512x128xbf16, #tpu.memory_space<vmem>>, vector<512x128xbf16>
    %cst_14 = arith.constant dense<0.000000e+00> : vector<16x128xf32>
    %18 = tpu.matmul %16, %17, %cst_14 {dimension_numbers = #tpu.dot_dimension_numbers<[1], [0], [0], [1], [0, 0, 1, 1], [], []>} : vector<16x512xbf16>, vector<512x128xbf16>, vector<16x128xf32> -> vector<16x128xf32>
    %c0_15 = arith.constant 0 : index
    %c0_16 = arith.constant 0 : index
    %19 = vector.load %arg7[%c0_15, %c0_16] : memref<1x128xf32, #tpu.memory_space<vmem>>, vector<1x128xf32>
    %20 = vector.broadcast %19 : vector<1x128xf32> to vector<16x128xf32>
    %21 = arith.addf %18, %20 : vector<16x128xf32>
    %c0_17 = arith.constant 0 : index
    %c0_18 = arith.constant 0 : index
    %22 = vector.load %arg8[%c0_17, %c0_18] : memref<16x128xf32, #tpu.memory_space<vmem>>, vector<16x128xf32>
    tpu.vector_store %arg8[%c0_17, %c0_18], %21 {strides = array<i32>} : memref<16x128xf32, #tpu.memory_space<vmem>>, vector<16x128xf32>,
    return
  }
  func.func @transform_0(%arg0: i32) -> (i32, i32) {
    %c0_i32 = arith.constant 0 : i32
    %c0_i32_0 = arith.constant 0 : i32
    return %arg0, %c0_i32 : i32, i32
  }
  func.func @transform_1(%arg0: i32) -> (i32, i32) {
    %c0_i32 = arith.constant 0 : i32
    %c0_i32_0 = arith.constant 0 : i32
    %c0_i32_1 = arith.constant 0 : i32
    return %c0_i32, %c0_i32_0 : i32, i32
  }
  func.func @transform_2(%arg0: i32) -> (i32, i32) {
    %c0_i32 = arith.constant 0 : i32
    %c0_i32_0 = arith.constant 0 : i32
    %c0_i32_1 = arith.constant 0 : i32
    return %c0_i32, %c0_i32_0 : i32, i32
  }
  func.func @transform_3(%arg0: i32) -> (i32, i32) {
    %c0_i32 = arith.constant 0 : i32
    %c0_i32_0 = arith.constant 0 : i32
    %c0_i32_1 = arith.constant 0 : i32
    return %c0_i32, %c0_i32_0 : i32, i32
  }
  func.func @transform_4(%arg0: i32) -> (i32, i32) {
    %c0_i32 = arith.constant 0 : i32
    %c0_i32_0 = arith.constant 0 : i32
    %c0_i32_1 = arith.constant 0 : i32
    return %c0_i32, %c0_i32_0 : i32, i32
  }
  func.func @transform_5(%arg0: i32) -> (i32, i32) {
    %c0_i32 = arith.constant 0 : i32
    %c0_i32_0 = arith.constant 0 : i32
    %c0_i32_1 = arith.constant 0 : i32
    return %c0_i32, %c0_i32_0 : i32, i32
  }
  func.func @transform_6(%arg0: i32) -> (i32, i32) {
    %c0_i32 = arith.constant 0 : i32
    %c0_i32_0 = arith.constant 0 : i32
    %c0_i32_1 = arith.constant 0 : i32
    return %c0_i32, %c0_i32_0 : i32, i32
  }
  func.func @transform_7(%arg0: i32) -> (i32, i32) {
    %c0_i32 = arith.constant 0 : i32
    %c0_i32_0 = arith.constant 0 : i32
    return %arg0, %c0_i32 : i32, i32
  }
}

</mosaic_0001>

<llo_original>
// kernel: mlp_forward.1
$region0: #{mlp_forward.1}
  #allocation0 [shape = 'u32[]', space=smem, size = 0x4, offset = 0x4, fixed_abs, tag = 'smem constant byte address 0x4 - core index']
  #allocation1 [shape = 'u32[72,128]{1,0:T(1,128)}', space=vmem, size = 0x9000, scoped, tag = 'internal scratch']
  %s0 = inlined_call_operand.vmem [shape: bf16[16,256], index: 0, kind: input, shape index: {}]
  %s1 = inlined_call_operand.vmem [shape: bf16[256,512], index: 1, kind: input, shape index: {}]
  %s2 = inlined_call_operand.vmem [shape: f32[1,512], index: 2, kind: input, shape index: {}]
  %s3 = inlined_call_operand.hbm [shape: bf16[512,512], index: 3, kind: input, shape index: {}]
  %s4 = inlined_call_operand.vmem [shape: f32[1,512], index: 4, kind: input, shape index: {}]
  %s5 = inlined_call_operand.hbm [shape: bf16[512,128], index: 5, kind: input, shape index: {}]
  %s6 = inlined_call_operand.vmem [shape: f32[1,128], index: 6, kind: input, shape index: {}]
  %s7 = inlined_call_operand.vmem [shape: f32[16,128], index: 7, kind: output, shape index: {}]
  %s8 = sld [smem:[#allocation0]]
  $region46: #{mlp_forward.1} parent=0
    _
  %s10 = ssub.s32 1, %s8
  %s11 = scalar_select 0, %s10, %s8
  $region1: #{mlp_forward.1} parent=0
    #allocation2 [shape = 'u8[524288]{0}', space=vmem, size = 0x80000, scoped, tag = 'input window, operand 3, single buffered']
    #allocation3 [shape = 's32[1]{0}', space=sflag, size = 0x4, scoped, tag = 'scoped memory for mlp_forward.1']
    #allocation4 [shape = 'u8[131072]{0}', space=vmem, size = 0x20000, scoped, tag = 'input window, operand 5, single buffered']
    #allocation5 [shape = 's32[1]{0}', space=sflag, size = 0x4, scoped, tag = 'scoped memory for mlp_forward.1']
    %12 = vsyncpa [#allocation3], 0
    %13 = vsyncpa [#allocation5], 0
    // Predicated region
    $region2: #{mlp_forward.1} parent=1 // pred_check
      _
    $region3: #{mlp_forward.1} parent=1 // pred_check_branch
      %15 = sbr.rel (0) target = $region5
    $region4: #{mlp_forward.1} parent=1 // pred_region
      _
    $region5: #{mlp_forward.1} parent=1 // pred_fallthru
      _
    // Predicated region
    $region6: #{mlp_forward.1} parent=1 // pred_check
      _
    $region7: #{mlp_forward.1} parent=1 // pred_check_branch
      %17 = sbr.rel (0) target = $region9
    $region8: #{mlp_forward.1} parent=1 // pred_region
      _
    $region9: #{mlp_forward.1} parent=1 // pred_fallthru
      _
    // Predicated region
    $region10: #{mlp_forward.1} parent=1 // pred_check
      _
    $region11: #{mlp_forward.1} parent=1 // pred_check_branch
      %19 = sbr.rel (0) target = $region13
    $region12: #{mlp_forward.1} parent=1 // pred_region
      _
    $region13: #{mlp_forward.1} parent=1 // pred_fallthru
      _
    // Predicated region
    $region14: #{mlp_forward.1} parent=1 // pred_check
      _
    $region15: #{mlp_forward.1} parent=1 // pred_check_branch
      %21 = sbr.rel (0) target = $region17
    $region16: #{mlp_forward.1} parent=1 // pred_region
      %23 = vsyncadd [#allocation3], 0
      %s24 = sshll.u32 %s3, 4
      %s25 = int_to_ptr.hbm [resolvable:$true] %s24
      %s26 = sshll.u32 [#allocation2], 4
      %s27 = int_to_ptr.vmem [resolvable:$true] %s26
      %32 = dma.hbm_to_vmem [thread:$0]  %s25, 16384, %s27, [#allocation3], 256, 256, 16
    $region17: #{mlp_forward.1} parent=1 // pred_fallthru
      _
    // Predicated region
    $region18: #{mlp_forward.1} parent=1 // pred_check
      _
    $region19: #{mlp_forward.1} parent=1 // pred_check_branch
      %34 = sbr.rel (0) target = $region21
    $region20: #{mlp_forward.1} parent=1 // pred_region
      _
    $region21: #{mlp_forward.1} parent=1 // pred_fallthru
      _
    // Predicated region
    $region22: #{mlp_forward.1} parent=1 // pred_check
      _
    $region23: #{mlp_forward.1} parent=1 // pred_check_branch
      %36 = sbr.rel (0) target = $region25
    $region24: #{mlp_forward.1} parent=1 // pred_region
      %38 = vsyncadd [#allocation5], 0
      %s39 = sshll.u32 %s5, 4
      %s40 = int_to_ptr.hbm [resolvable:$true] %s39
      %s41 = sshll.u32 [#allocation4], 4
      %s42 = int_to_ptr.vmem [resolvable:$true] %s41
      %47 = dma.hbm_to_vmem [thread:$0]  %s40, 4096, %s42, [#allocation5], 64, 64, 4
    $region25: #{mlp_forward.1} parent=1 // pred_fallthru
      _
    // Predicated region
    $region26: #{mlp_forward.1} parent=1 // pred_check
      _
    $region27: #{mlp_forward.1} parent=1 // pred_check_branch
      %49 = sbr.rel (0) target = $region29
    $region28: #{mlp_forward.1} parent=1 // pred_region
      _
    $region29: #{mlp_forward.1} parent=1 // pred_fallthru
      _
    // Predicated region
    $region30: #{mlp_forward.1} parent=1 // pred_check
      _
    $region31: #{mlp_forward.1} parent=1 // pred_check_branch
      %51 = sbr.rel (0) target = $region33
    $region32: #{mlp_forward.1} parent=1 // pred_region
      %53 = dma.done [#allocation3], 16384
    $region33: #{mlp_forward.1} parent=1 // pred_fallthru
      _
    // Predicated region
    $region34: #{mlp_forward.1} parent=1 // pred_check
      _
    $region35: #{mlp_forward.1} parent=1 // pred_check_branch
      %55 = sbr.rel (0) target = $region37
    $region36: #{mlp_forward.1} parent=1 // pred_region
      %57 = dma.done [#allocation5], 4096
    $region37: #{mlp_forward.1} parent=1 // pred_fallthru
      _
    %v58 = vld [vmem:[%s0] sm:$0xff]
    %v59 = vld [vmem:[%s0 + $0x8] sm:$0xff]
    %v60 = vld [vmem:[%s1] sm:$0xff]
    %v61 = vld [vmem:[%s1 + $0x8] sm:$0xff]
    %v62 = vld [vmem:[%s1 + $0x10] sm:$0xff]
    %v63 = vld [vmem:[%s1 + $0x18] sm:$0xff]
    %v64 = vld [vmem:[%s1 + $0x20] sm:$0xff]
    %v65 = vld [vmem:[%s1 + $0x28] sm:$0xff]
    %v66 = vld [vmem:[%s1 + $0x30] sm:$0xff]
    %v67 = vld [vmem:[%s1 + $0x38] sm:$0xff]
    %v68 = vld [vmem:[%s1 + $0x40] sm:$0xff]
    %v69 = vld [vmem:[%s1 + $0x48] sm:$0xff]
    %v70 = vld [vmem:[%s1 + $0x50] sm:$0xff]
    %v71 = vld [vmem:[%s1 + $0x58] sm:$0xff]
    %v72 = vld [vmem:[%s1 + $0x60] sm:$0xff]
    %v73 = vld [vmem:[%s1 + $0x68] sm:$0xff]
    %v74 = vld [vmem:[%s1 + $0x70] sm:$0xff]
    %v75 = vld [vmem:[%s1 + $0x78] sm:$0xff]
    %v76 = vld [vmem:[%s1 + $0x80] sm:$0xff]
    %v77 = vld [vmem:[%s1 + $0x88] sm:$0xff]
    %v78 = vld [vmem:[%s1 + $0x90] sm:$0xff]
    %v79 = vld [vmem:[%s1 + $0x98] sm:$0xff]
    %v80 = vld [vmem:[%s1 + $0xa0] sm:$0xff]
    %v81 = vld [vmem:[%s1 + $0xa8] sm:$0xff]
    %v82 = vld [vmem:[%s1 + $0xb0] sm:$0xff]
    %v83 = vld [vmem:[%s1 + $0xb8] sm:$0xff]
    %v84 = vld [vmem:[%s1 + $0xc0] sm:$0xff]
    %v85 = vld [vmem:[%s1 + $0xc8] sm:$0xff]
    %v86 = vld [vmem:[%s1 + $0xd0] sm:$0xff]
    %v87 = vld [vmem:[%s1 + $0xd8] sm:$0xff]
    %v88 = vld [vmem:[%s1 + $0xe0] sm:$0xff]
    %v89 = vld [vmem:[%s1 + $0xe8] sm:$0xff]
    %v90 = vld [vmem:[%s1 + $0xf0] sm:$0xff]
    %v91 = vld [vmem:[%s1 + $0xf8] sm:$0xff]
    %v92 = vld [vmem:[%s1 + $0x100] sm:$0xff]
    %v93 = vld [vmem:[%s1 + $0x108] sm:$0xff]
    %v94 = vld [vmem:[%s1 + $0x110] sm:$0xff]
    %v95 = vld [vmem:[%s1 + $0x118] sm:$0xff]
    %v96 = vld [vmem:[%s1 + $0x120] sm:$0xff]
    %v97 = vld [vmem:[%s1 + $0x128] sm:$0xff]
    %v98 = vld [vmem:[%s1 + $0x130] sm:$0xff]
    %v99 = vld [vmem:[%s1 + $0x138] sm:$0xff]
    %v100 = vld [vmem:[%s1 + $0x140] sm:$0xff]
    %v101 = vld [vmem:[%s1 + $0x148] sm:$0xff]
    %v102 = vld [vmem:[%s1 + $0x150] sm:$0xff]
    %v103 = vld [vmem:[%s1 + $0x158] sm:$0xff]
    %v104 = vld [vmem:[%s1 + $0x160] sm:$0xff]
    %v105 = vld [vmem:[%s1 + $0x168] sm:$0xff]
    %v106 = vld [vmem:[%s1 + $0x170] sm:$0xff]
    %v107 = vld [vmem:[%s1 + $0x178] sm:$0xff]
    %v108 = vld [vmem:[%s1 + $0x180] sm:$0xff]
    %v109 = vld [vmem:[%s1 + $0x188] sm:$0xff]
    %v110 = vld [vmem:[%s1 + $0x190] sm:$0xff]
    %v111 = vld [vmem:[%s1 + $0x198] sm:$0xff]
    %v112 = vld [vmem:[%s1 + $0x1a0] sm:$0xff]
    %v113 = vld [vmem:[%s1 + $0x1a8] sm:$0xff]
    %v114 = vld [vmem:[%s1 + $0x1b0] sm:$0xff]
    %v115 = vld [vmem:[%s1 + $0x1b8] sm:$0xff]
    %v116 = vld [vmem:[%s1 + $0x1c0] sm:$0xff]
    %v117 = vld [vmem:[%s1 + $0x1c8] sm:$0xff]
    %v118 = vld [vmem:[%s1 + $0x1d0] sm:$0xff]
    %v119 = vld [vmem:[%s1 + $0x1d8] sm:$0xff]
    %v120 = vld [vmem:[%s1 + $0x1e0] sm:$0xff]
    %v121 = vld [vmem:[%s1 + $0x1e8] sm:$0xff]
    %v122 = vld [vmem:[%s1 + $0x1f0] sm:$0xff]
    %v123 = vld [vmem:[%s1 + $0x1f8] sm:$0xff]
    %v124 = vld [vmem:[%s2] sm:$0xf]
    %v126 = vperm.slane %v124, 0
    %v127 = vperm.slane %v124, 1
    %v128 = vperm.slane %v124, 2
    %v129 = vperm.slane %v124, 3
    %v136 = vunpack.c.l.b16 %v58
    %v137 = vunpack.c.h.b16 %v58
    %v138 = vunpack.c.l.b16 %v59
    %v139 = vunpack.c.h.b16 %v59
    %v140 = vpack.c.b16 %v138, %v136
    %v141 = vpack.c.b16 %v139, %v137
    %v208 = vunpack.c.l.b16 %v60
    %v209 = vunpack.c.h.b16 %v60
    %v210 = vunpack.c.l.b16 %v61
    %v211 = vunpack.c.h.b16 %v61
    %v212 = vunpack.c.l.b16 %v62
    %v213 = vunpack.c.h.b16 %v62
    %v214 = vunpack.c.l.b16 %v63
    %v215 = vunpack.c.h.b16 %v63
    %v216 = vunpack.c.l.b16 %v64
    %v217 = vunpack.c.h.b16 %v64
    %v218 = vunpack.c.l.b16 %v65
    %v219 = vunpack.c.h.b16 %v65
    %v220 = vunpack.c.l.b16 %v66
    %v221 = vunpack.c.h.b16 %v66
    %v222 = vunpack.c.l.b16 %v67
    %v223 = vunpack.c.h.b16 %v67
    %v224 = vunpack.c.l.b16 %v68
    %v225 = vunpack.c.h.b16 %v68
    %v226 = vunpack.c.l.b16 %v69
    %v227 = vunpack.c.h.b16 %v69
    %v228 = vunpack.c.l.b16 %v70
    %v229 = vunpack.c.h.b16 %v70
    %v230 = vunpack.c.l.b16 %v71
    %v231 = vunpack.c.h.b16 %v71
    %v232 = vunpack.c.l.b16 %v72
    %v233 = vunpack.c.h.b16 %v72
    %v234 = vunpack.c.l.b16 %v73
    %v235 = vunpack.c.h.b16 %v73
    %v236 = vunpack.c.l.b16 %v74
    %v237 = vunpack.c.h.b16 %v74
    %v238 = vunpack.c.l.b16 %v75
    %v239 = vunpack.c.h.b16 %v75
    %v240 = vunpack.c.l.b16 %v76
    %v241 = vunpack.c.h.b16 %v76
    %v242 = vunpack.c.l.b16 %v77
    %v243 = vunpack.c.h.b16 %v77
    %v244 = vunpack.c.l.b16 %v78
    %v245 = vunpack.c.h.b16 %v78
    %v246 = vunpack.c.l.b16 %v79
    %v247 = vunpack.c.h.b16 %v79
    %v248 = vunpack.c.l.b16 %v80
    %v249 = vunpack.c.h.b16 %v80
    %v250 = vunpack.c.l.b16 %v81
    %v251 = vunpack.c.h.b16 %v81
    %v252 = vunpack.c.l.b16 %v82
    %v253 = vunpack.c.h.b16 %v82
    %v254 = vunpack.c.l.b16 %v83
    %v255 = vunpack.c.h.b16 %v83
    %v256 = vunpack.c.l.b16 %v84
    %v257 = vunpack.c.h.b16 %v84
    %v258 = vunpack.c.l.b16 %v85
    %v259 = vunpack.c.h.b16 %v85
    %v260 = vunpack.c.l.b16 %v86
    %v261 = vunpack.c.h.b16 %v86
    %v262 = vunpack.c.l.b16 %v87
    %v263 = vunpack.c.h.b16 %v87
    %v264 = vunpack.c.l.b16 %v88
    %v265 = vunpack.c.h.b16 %v88
    %v266 = vunpack.c.l.b16 %v89
    %v267 = vunpack.c.h.b16 %v89
    %v268 = vunpack.c.l.b16 %v90
    %v269 = vunpack.c.h.b16 %v90
    %v270 = vunpack.c.l.b16 %v91
    %v271 = vunpack.c.h.b16 %v91
    %v272 = vunpack.c.l.b16 %v92
    %v273 = vunpack.c.h.b16 %v92
    %v274 = vunpack.c.l.b16 %v93
    %v275 = vunpack.c.h.b16 %v93
    %v276 = vunpack.c.l.b16 %v94
    %v277 = vunpack.c.h.b16 %v94
    %v278 = vunpack.c.l.b16 %v95
    %v279 = vunpack.c.h.b16 %v95
    %v280 = vunpack.c.l.b16 %v96
    %v281 = vunpack.c.h.b16 %v96
    %v282 = vunpack.c.l.b16 %v97
    %v283 = vunpack.c.h.b16 %v97
    %v284 = vunpack.c.l.b16 %v98
    %v285 = vunpack.c.h.b16 %v98
    %v286 = vunpack.c.l.b16 %v99
    %v287 = vunpack.c.h.b16 %v99
    %v288 = vunpack.c.l.b16 %v100
    %v289 = vunpack.c.h.b16 %v100
    %v290 = vunpack.c.l.b16 %v101
    %v291 = vunpack.c.h.b16 %v101
    %v292 = vunpack.c.l.b16 %v102
    %v293 = vunpack.c.h.b16 %v102
    %v294 = vunpack.c.l.b16 %v103
    %v295 = vunpack.c.h.b16 %v103
    %v296 = vunpack.c.l.b16 %v104
    %v297 = vunpack.c.h.b16 %v104
    %v298 = vunpack.c.l.b16 %v105
    %v299 = vunpack.c.h.b16 %v105
    %v300 = vunpack.c.l.b16 %v106
    %v301 = vunpack.c.h.b16 %v106
    %v302 = vunpack.c.l.b16 %v107
    %v303 = vunpack.c.h.b16 %v107
    %v304 = vunpack.c.l.b16 %v108
    %v305 = vunpack.c.h.b16 %v108
    %v306 = vunpack.c.l.b16 %v109
    %v307 = vunpack.c.h.b16 %v109
    %v308 = vunpack.c.l.b16 %v110
    %v309 = vunpack.c.h.b16 %v110
    %v310 = vunpack.c.l.b16 %v111
    %v311 = vunpack.c.h.b16 %v111
    %v312 = vunpack.c.l.b16 %v112
    %v313 = vunpack.c.h.b16 %v112
    %v314 = vunpack.c.l.b16 %v113
    %v315 = vunpack.c.h.b16 %v113
    %v316 = vunpack.c.l.b16 %v114
    %v317 = vunpack.c.h.b16 %v114
    %v318 = vunpack.c.l.b16 %v115
    %v319 = vunpack.c.h.b16 %v115
    %v320 = vunpack.c.l.b16 %v116
    %v321 = vunpack.c.h.b16 %v116
    %v322 = vunpack.c.l.b16 %v117
    %v323 = vunpack.c.h.b16 %v117
    %v324 = vunpack.c.l.b16 %v118
    %v325 = vunpack.c.h.b16 %v118
    %v326 = vunpack.c.l.b16 %v119
    %v327 = vunpack.c.h.b16 %v119
    %v328 = vunpack.c.l.b16 %v120
    %v329 = vunpack.c.h.b16 %v120
    %v330 = vunpack.c.l.b16 %v121
    %v331 = vunpack.c.h.b16 %v121
    %v332 = vunpack.c.l.b16 %v122
    %v333 = vunpack.c.h.b16 %v122
    %v334 = vunpack.c.l.b16 %v123
    %v335 = vunpack.c.h.b16 %v123
    %v336 = vpack.c.b16 %v212, %v208
    %v337 = vpack.c.b16 %v213, %v209
    %v338 = vpack.c.b16 %v214, %v210
    %v339 = vpack.c.b16 %v215, %v211
    %v340 = vpack.c.b16 %v220, %v216
    %v341 = vpack.c.b16 %v221, %v217
    %v342 = vpack.c.b16 %v222, %v218
    %v343 = vpack.c.b16 %v223, %v219
    %v344 = vpack.c.b16 %v228, %v224
    %v345 = vpack.c.b16 %v229, %v225
    %v346 = vpack.c.b16 %v230, %v226
    %v347 = vpack.c.b16 %v231, %v227
    %v348 = vpack.c.b16 %v236, %v232
    %v349 = vpack.c.b16 %v237, %v233
    %v350 = vpack.c.b16 %v238, %v234
    %v351 = vpack.c.b16 %v239, %v235
    %v352 = vpack.c.b16 %v244, %v240
    %v353 = vpack.c.b16 %v245, %v241
    %v354 = vpack.c.b16 %v246, %v242
    %v355 = vpack.c.b16 %v247, %v243
    %v356 = vpack.c.b16 %v252, %v248
    %v357 = vpack.c.b16 %v253, %v249
    %v358 = vpack.c.b16 %v254, %v250
    %v359 = vpack.c.b16 %v255, %v251
    %v360 = vpack.c.b16 %v260, %v256
    %v361 = vpack.c.b16 %v261, %v257
    %v362 = vpack.c.b16 %v262, %v258
    %v363 = vpack.c.b16 %v263, %v259
    %v364 = vpack.c.b16 %v268, %v264
    %v365 = vpack.c.b16 %v269, %v265
    %v366 = vpack.c.b16 %v270, %v266
    %v367 = vpack.c.b16 %v271, %v267
    %v368 = vpack.c.b16 %v276, %v272
    %v369 = vpack.c.b16 %v277, %v273
    %v370 = vpack.c.b16 %v278, %v274
    %v371 = vpack.c.b16 %v279, %v275
    %v372 = vpack.c.b16 %v284, %v280
    %v373 = vpack.c.b16 %v285, %v281
    %v374 = vpack.c.b16 %v286, %v282
    %v375 = vpack.c.b16 %v287, %v283
    %v376 = vpack.c.b16 %v292, %v288
    %v377 = vpack.c.b16 %v293, %v289
    %v378 = vpack.c.b16 %v294, %v290
    %v379 = vpack.c.b16 %v295, %v291
    %v380 = vpack.c.b16 %v300, %v296
    %v381 = vpack.c.b16 %v301, %v297
    %v382 = vpack.c.b16 %v302, %v298
    %v383 = vpack.c.b16 %v303, %v299
    %v384 = vpack.c.b16 %v308, %v304
    %v385 = vpack.c.b16 %v309, %v305
    %v386 = vpack.c.b16 %v310, %v306
    %v387 = vpack.c.b16 %v311, %v307
    %v388 = vpack.c.b16 %v316, %v312
    %v389 = vpack.c.b16 %v317, %v313
    %v390 = vpack.c.b16 %v318, %v314
    %v391 = vpack.c.b16 %v319, %v315
    %v392 = vpack.c.b16 %v324, %v320
    %v393 = vpack.c.b16 %v325, %v321
    %v394 = vpack.c.b16 %v326, %v322
    %v395 = vpack.c.b16 %v327, %v323
    %v396 = vpack.c.b16 %v332, %v328
    %v397 = vpack.c.b16 %v333, %v329
    %v398 = vpack.c.b16 %v334, %v330
    %v399 = vpack.c.b16 %v335, %v331
    %464 = vmatpush.bf16.msra.mxu0 %v364
    %465 = vmatpush.bf16.msra.mxu0 %v360
    %466 = vmatpush.bf16.msra.mxu0 %v356
    %467 = vmatpush.bf16.msra.mxu0 %v352
    %468 = vmatpush.bf16.msra.mxu0 %v348
    %469 = vmatpush.bf16.msra.mxu0 %v344
    %470 = vmatpush.bf16.msra.mxu0 %v340
    %471 = vmatpush.bf16.msra.mxu0 %v336
    %472 = vmatmul.bf16.gmra.mxu0 %v140
    %v473 = vpop.f32.mrf.mxu0
    %v474 = vadd.f32 %v126, %v473
    %v475 = vpop.f32.mrf.mxu0
    %v476 = vadd.f32 %v126, %v475
    %477 = vdwg.mxu0
    %478 = vmatpush.bf16.msra.mxu0 %v396
    %479 = vmatpush.bf16.msra.mxu0 %v392
    %480 = vmatpush.bf16.msra.mxu0 %v388
    %481 = vmatpush.bf16.msra.mxu0 %v384
    %482 = vmatpush.bf16.msra.mxu0 %v380
    %483 = vmatpush.bf16.msra.mxu0 %v376
    %484 = vmatpush.bf16.msra.mxu0 %v372
    %485 = vmatpush.bf16.msra.mxu0 %v368
    %486 = vmatmul.bf16.gmra.mxu0 %v141
    %v487 = vpop.f32.mrf.mxu0
    %v488 = vadd.f32 %v474, %v487
    %v489 = vpop.f32.mrf.mxu0
    %v490 = vadd.f32 %v476, %v489
    %491 = vdwg.mxu0
    %492 = vmatpush.bf16.msra.mxu0 %v365
    %493 = vmatpush.bf16.msra.mxu0 %v361
    %494 = vmatpush.bf16.msra.mxu0 %v357
    %495 = vmatpush.bf16.msra.mxu0 %v353
    %496 = vmatpush.bf16.msra.mxu0 %v349
    %497 = vmatpush.bf16.msra.mxu0 %v345
    %498 = vmatpush.bf16.msra.mxu0 %v341
    %499 = vmatpush.bf16.msra.mxu0 %v337
    %500 = vmatmul.bf16.gmra.mxu0 %v140
    %v501 = vpop.f32.mrf.mxu0
    %v502 = vadd.f32 %v127, %v501
    %v503 = vpop.f32.mrf.mxu0
    %v504 = vadd.f32 %v127, %v503
    %505 = vdwg.mxu0
    %506 = vmatpush.bf16.msra.mxu0 %v397
    %507 = vmatpush.bf16.msra.mxu0 %v393
    %508 = vmatpush.bf16.msra.mxu0 %v389
    %509 = vmatpush.bf16.msra.mxu0 %v385
    %510 = vmatpush.bf16.msra.mxu0 %v381
    %511 = vmatpush.bf16.msra.mxu0 %v377
    %512 = vmatpush.bf16.msra.mxu0 %v373
    %513 = vmatpush.bf16.msra.mxu0 %v369
    %514 = vmatmul.bf16.gmra.mxu0 %v141
    %v515 = vpop.f32.mrf.mxu0
    %v516 = vadd.f32 %v502, %v515
    %v517 = vpop.f32.mrf.mxu0
    %v518 = vadd.f32 %v504, %v517
    %519 = vdwg.mxu0
    %520 = vmatpush.bf16.msra.mxu0 %v366
    %521 = vmatpush.bf16.msra.mxu0 %v362
    %522 = vmatpush.bf16.msra.mxu0 %v358
    %523 = vmatpush.bf16.msra.mxu0 %v354
    %524 = vmatpush.bf16.msra.mxu0 %v350
    %525 = vmatpush.bf16.msra.mxu0 %v346
    %526 = vmatpush.bf16.msra.mxu0 %v342
    %527 = vmatpush.bf16.msra.mxu0 %v338
    %528 = vmatmul.bf16.gmra.mxu0 %v140
    %v529 = vpop.f32.mrf.mxu0
    %v530 = vadd.f32 %v128, %v529
    %v531 = vpop.f32.mrf.mxu0
    %v532 = vadd.f32 %v128, %v531
    %533 = vdwg.mxu0
    %534 = vmatpush.bf16.msra.mxu0 %v398
    %535 = vmatpush.bf16.msra.mxu0 %v394
    %536 = vmatpush.bf16.msra.mxu0 %v390
    %537 = vmatpush.bf16.msra.mxu0 %v386
    %538 = vmatpush.bf16.msra.mxu0 %v382
    %539 = vmatpush.bf16.msra.mxu0 %v378
    %540 = vmatpush.bf16.msra.mxu0 %v374
    %541 = vmatpush.bf16.msra.mxu0 %v370
    %542 = vmatmul.bf16.gmra.mxu0 %v141
    %v543 = vpop.f32.mrf.mxu0
    %v544 = vadd.f32 %v530, %v543
    %v545 = vpop.f32.mrf.mxu0
    %v546 = vadd.f32 %v532, %v545
    %547 = vdwg.mxu0
    %548 = vmatpush.bf16.msra.mxu0 %v367
    %549 = vmatpush.bf16.msra.mxu0 %v363
    %550 = vmatpush.bf16.msra.mxu0 %v359
    %551 = vmatpush.bf16.msra.mxu0 %v355
    %552 = vmatpush.bf16.msra.mxu0 %v351
    %553 = vmatpush.bf16.msra.mxu0 %v347
    %554 = vmatpush.bf16.msra.mxu0 %v343
    %555 = vmatpush.bf16.msra.mxu0 %v339
    %556 = vmatmul.bf16.gmra.mxu0 %v140
    %v557 = vpop.f32.mrf.mxu0
    %v558 = vadd.f32 %v129, %v557
    %v559 = vpop.f32.mrf.mxu0
    %v560 = vadd.f32 %v129, %v559
    %561 = vdwg.mxu0
    %562 = vmatpush.bf16.msra.mxu0 %v399
    %563 = vmatpush.bf16.msra.mxu0 %v395
    %564 = vmatpush.bf16.msra.mxu0 %v391
    %565 = vmatpush.bf16.msra.mxu0 %v387
    %566 = vmatpush.bf16.msra.mxu0 %v383
    %567 = vmatpush.bf16.msra.mxu0 %v379
    %568 = vmatpush.bf16.msra.mxu0 %v375
    %569 = vmatpush.bf16.msra.mxu0 %v371
    %570 = vmatmul.bf16.gmra.mxu0 %v141
    %v571 = vpop.f32.mrf.mxu0
    %v572 = vadd.f32 %v558, %v571
    %v573 = vpop.f32.mrf.mxu0
    %v574 = vadd.f32 %v560, %v573
    %575 = vdwg.mxu0
    %v576 = vmax.f32 %v488, 0.0
    %v577 = vmax.f32 %v516, 0.0
    %v578 = vmax.f32 %v544, 0.0
    %v579 = vmax.f32 %v572, 0.0
    %v580 = vmax.f32 %v490, 0.0
    %v581 = vmax.f32 %v518, 0.0
    %v582 = vmax.f32 %v546, 0.0
    %v583 = vmax.f32 %v574, 0.0
    %v584 = vpack.c.bf16 %v580, %v576
    %v585 = vpack.c.bf16 %v581, %v577
    %v586 = vpack.c.bf16 %v582, %v578
    %v587 = vpack.c.bf16 %v583, %v579
    %v588 = vld [vmem:[#allocation2] sm:$0xff]
    %v589 = vld [vmem:[#allocation2 + $0x8] sm:$0xff]
    %v590 = vld [vmem:[#allocation2 + $0x10] sm:$0xff]
    %v591 = vld [vmem:[#allocation2 + $0x18] sm:$0xff]
    %v592 = vld [vmem:[#allocation2 + $0x20] sm:$0xff]
    %v593 = vld [vmem:[#allocation2 + $0x28] sm:$0xff]
    %v594 = vld [vmem:[#allocation2 + $0x30] sm:$0xff]
    %v595 = vld [vmem:[#allocation2 + $0x38] sm:$0xff]
    %v596 = vld [vmem:[#allocation2 + $0x40] sm:$0xff]
    %v597 = vld [vmem:[#allocation2 + $0x48] sm:$0xff]
    %v598 = vld [vmem:[#allocation2 + $0x50] sm:$0xff]
    %v599 = vld [vmem:[#allocation2 + $0x58] sm:$0xff]
    %v600 = vld [vmem:[#allocation2 + $0x60] sm:$0xff]
    %v601 = vld [vmem:[#allocation2 + $0x68] sm:$0xff]
    %v602 = vld [vmem:[#allocation2 + $0x70] sm:$0xff]
    %v603 = vld [vmem:[#allocation2 + $0x78] sm:$0xff]
    %v604 = vld [vmem:[#allocation2 + $0x80] sm:$0xff]
    %v605 = vld [vmem:[#allocation2 + $0x88] sm:$0xff]
    %v606 = vld [vmem:[#allocation2 + $0x90] sm:$0xff]
    %v607 = vld [vmem:[#allocation2 + $0x98] sm:$0xff]
    %v608 = vld [vmem:[#allocation2 + $0xa0] sm:$0xff]
    %v609 = vld [vmem:[#allocation2 + $0xa8] sm:$0xff]
    %v610 = vld [vmem:[#allocation2 + $0xb0] sm:$0xff]
    %v611 = vld [vmem:[#allocation2 + $0xb8] sm:$0xff]
    %v612 = vld [vmem:[#allocation2 + $0xc0] sm:$0xff]
    %v613 = vld [vmem:[#allocation2 + $0xc8] sm:$0xff]
    %v614 = vld [vmem:[#allocation2 + $0xd0] sm:$0xff]
    %v615 = vld [vmem:[#allocation2 + $0xd8] sm:$0xff]
    %v616 = vld [vmem:[#allocation2 + $0xe0] sm:$0xff]
    %v617 = vld [vmem:[#allocation2 + $0xe8] sm:$0xff]
    %v618 = vld [vmem:[#allocation2 + $0xf0] sm:$0xff]
    %v619 = vld [vmem:[#allocation2 + $0xf8] sm:$0xff]
    %v620 = vld [vmem:[#allocation2 + $0x100] sm:$0xff]
    %v621 = vld [vmem:[#allocation2 + $0x108] sm:$0xff]
    %v622 = vld [vmem:[#allocation2 + $0x110] sm:$0xff]
    %v623 = vld [vmem:[#allocation2 + $0x118] sm:$0xff]
    %v624 = vld [vmem:[#allocation2 + $0x120] sm:$0xff]
    %v625 = vld [vmem:[#allocation2 + $0x128] sm:$0xff]
    %v626 = vld [vmem:[#allocation2 + $0x130] sm:$0xff]
    %v627 = vld [vmem:[#allocation2 + $0x138] sm:$0xff]
    %v628 = vld [vmem:[#allocation2 + $0x140] sm:$0xff]
    %v629 = vld [vmem:[#allocation2 + $0x148] sm:$0xff]
    %v630 = vld [vmem:[#allocation2 + $0x150] sm:$0xff]
    %v631 = vld [vmem:[#allocation2 + $0x158] sm:$0xff]
    %v632 = vld [vmem:[#allocation2 + $0x160] sm:$0xff]
    %v633 = vld [vmem:[#allocation2 + $0x168] sm:$0xff]
    %v634 = vld [vmem:[#allocation2 + $0x170] sm:$0xff]
    %v635 = vld [vmem:[#allocation2 + $0x178] sm:$0xff]
    %v636 = vld [vmem:[#allocation2 + $0x180] sm:$0xff]
    %v637 = vld [vmem:[#allocation2 + $0x188] sm:$0xff]
    %v638 = vld [vmem:[#allocation2 + $0x190] sm:$0xff]
    %v639 = vld [vmem:[#allocation2 + $0x198] sm:$0xff]
    %v640 = vld [vmem:[#allocation2 + $0x1a0] sm:$0xff]
    %v641 = vld [vmem:[#allocation2 + $0x1a8] sm:$0xff]
    %v642 = vld [vmem:[#allocation2 + $0x1b0] sm:$0xff]
    %v643 = vld [vmem:[#allocation2 + $0x1b8] sm:$0xff]
    %v644 = vld [vmem:[#allocation2 + $0x1c0] sm:$0xff]
    %v645 = vld [vmem:[#allocation2 + $0x1c8] sm:$0xff]
    %v646 = vld [vmem:[#allocation2 + $0x1d0] sm:$0xff]
    %v647 = vld [vmem:[#allocation2 + $0x1d8] sm:$0xff]
    %v648 = vld [vmem:[#allocation2 + $0x1e0] sm:$0xff]
    %v649 = vld [vmem:[#allocation2 + $0x1e8] sm:$0xff]
    %v650 = vld [vmem:[#allocation2 + $0x1f0] sm:$0xff]
    %v651 = vld [vmem:[#allocation2 + $0x1f8] sm:$0xff]
    %v652 = vld [vmem:[#allocation2 + $0x200] sm:$0xff]
    %v653 = vld [vmem:[#allocation2 + $0x208] sm:$0xff]
    %v654 = vld [vmem:[#allocation2 + $0x210] sm:$0xff]
    %v655 = vld [vmem:[#allocation2 + $0x218] sm:$0xff]
    %v656 = vld [vmem:[#allocation2 + $0x220] sm:$0xff]
    %v657 = vld [vmem:[#allocation2 + $0x228] sm:$0xff]
    %v658 = vld [vmem:[#allocation2 + $0x230] sm:$0xff]
    %v659 = vld [vmem:[#allocation2 + $0x238] sm:$0xff]
    %v660 = vld [vmem:[#allocation2 + $0x240] sm:$0xff]
    %v661 = vld [vmem:[#allocation2 + $0x248] sm:$0xff]
    %v662 = vld [vmem:[#allocation2 + $0x250] sm:$0xff]
    %v663 = vld [vmem:[#allocation2 + $0x258] sm:$0xff]
    %v664 = vld [vmem:[#allocation2 + $0x260] sm:$0xff]
    %v665 = vld [vmem:[#allocation2 + $0x268] sm:$0xff]
    %v666 = vld [vmem:[#allocation2 + $0x270] sm:$0xff]
    %v667 = vld [vmem:[#allocation2 + $0x278] sm:$0xff]
    %v668 = vld [vmem:[#allocation2 + $0x280] sm:$0xff]
    %v669 = vld [vmem:[#allocation2 + $0x288] sm:$0xff]
    %v670 = vld [vmem:[#allocation2 + $0x290] sm:$0xff]
    %v671 = vld [vmem:[#allocation2 + $0x298] sm:$0xff]
    %v672 = vld [vmem:[#allocation2 + $0x2a0] sm:$0xff]
    %v673 = vld [vmem:[#allocation2 + $0x2a8] sm:$0xff]
    %v674 = vld [vmem:[#allocation2 + $0x2b0] sm:$0xff]
    %v675 = vld [vmem:[#allocation2 + $0x2b8] sm:$0xff]
    %v676 = vld [vmem:[#allocation2 + $0x2c0] sm:$0xff]
    %v677 = vld [vmem:[#allocation2 + $0x2c8] sm:$0xff]
    %v678 = vld [vmem:[#allocation2 + $0x2d0] sm:$0xff]
    %v679 = vld [vmem:[#allocation2 + $0x2d8] sm:$0xff]
    %v680 = vld [vmem:[#allocation2 + $0x2e0] sm:$0xff]
    %v681 = vld [vmem:[#allocation2 + $0x2e8] sm:$0xff]
    %v682 = vld [vmem:[#allocation2 + $0x2f0] sm:$0xff]
    %v683 = vld [vmem:[#allocation2 + $0x2f8] sm:$0xff]
    %v684 = vld [vmem:[#allocation2 + $0x300] sm:$0xff]
    %v685 = vld [vmem:[#allocation2 + $0x308] sm:$0xff]
    %v686 = vld [vmem:[#allocation2 + $0x310] sm:$0xff]
    %v687 = vld [vmem:[#allocation2 + $0x318] sm:$0xff]
    %v688 = vld [vmem:[#allocation2 + $0x320] sm:$0xff]
    %v689 = vld [vmem:[#allocation2 + $0x328] sm:$0xff]
    %v690 = vld [vmem:[#allocation2 + $0x330] sm:$0xff]
    %v691 = vld [vmem:[#allocation2 + $0x338] sm:$0xff]
    %v692 = vld [vmem:[#allocation2 + $0x340] sm:$0xff]
    %v693 = vld [vmem:[#allocation2 + $0x348] sm:$0xff]
    %v694 = vld [vmem:[#allocation2 + $0x350] sm:$0xff]
    %v695 = vld [vmem:[#allocation2 + $0x358] sm:$0xff]
    %v696 = vld [vmem:[#allocation2 + $0x360] sm:$0xff]
    %v697 = vld [vmem:[#allocation2 + $0x368] sm:$0xff]
    %v698 = vld [vmem:[#allocation2 + $0x370] sm:$0xff]
    %v699 = vld [vmem:[#allocation2 + $0x378] sm:$0xff]
    %v700 = vld [vmem:[#allocation2 + $0x380] sm:$0xff]
    %v701 = vld [vmem:[#allocation2 + $0x388] sm:$0xff]
    %v702 = vld [vmem:[#allocation2 + $0x390] sm:$0xff]
    %v703 = vld [vmem:[#allocation2 + $0x398] sm:$0xff]
    %v704 = vld [vmem:[#allocation2 + $0x3a0] sm:$0xff]
    %v705 = vld [vmem:[#allocation2 + $0x3a8] sm:$0xff]
    %v706 = vld [vmem:[#allocation2 + $0x3b0] sm:$0xff]
    %v707 = vld [vmem:[#allocation2 + $0x3b8] sm:$0xff]
    %v708 = vld [vmem:[#allocation2 + $0x3c0] sm:$0xff]
    %v709 = vld [vmem:[#allocation2 + $0x3c8] sm:$0xff]
    %v710 = vld [vmem:[#allocation2 + $0x3d0] sm:$0xff]
    %v711 = vld [vmem:[#allocation2 + $0x3d8] sm:$0xff]
    %v712 = vld [vmem:[#allocation2 + $0x3e0] sm:$0xff]
    %v713 = vld [vmem:[#allocation2 + $0x3e8] sm:$0xff]
    %v714 = vld [vmem:[#allocation2 + $0x3f0] sm:$0xff]
    %v715 = vld [vmem:[#allocation2 + $0x3f8] sm:$0xff]
    %v716 = vld [vmem:[%s4] sm:$0xf]
    %v718 = vperm.slane %v716, 0
    %v719 = vperm.slane %v716, 1
    %v720 = vperm.slane %v716, 2
    %v721 = vperm.slane %v716, 3
    %v854 = vunpack.c.l.b16 %v588
    %v855 = vunpack.c.h.b16 %v588
    %v856 = vunpack.c.l.b16 %v589
    %v857 = vunpack.c.h.b16 %v589
    %v858 = vunpack.c.l.b16 %v590
    %v859 = vunpack.c.h.b16 %v590
    %v860 = vunpack.c.l.b16 %v591
    %v861 = vunpack.c.h.b16 %v591
    %v862 = vunpack.c.l.b16 %v592
    %v863 = vunpack.c.h.b16 %v592
    %v864 = vunpack.c.l.b16 %v593
    %v865 = vunpack.c.h.b16 %v593
    %v866 = vunpack.c.l.b16 %v594
    %v867 = vunpack.c.h.b16 %v594
    %v868 = vunpack.c.l.b16 %v595
    %v869 = vunpack.c.h.b16 %v595
    %v870 = vunpack.c.l.b16 %v596
    %v871 = vunpack.c.h.b16 %v596
    %v872 = vunpack.c.l.b16 %v597
    %v873 = vunpack.c.h.b16 %v597
    %v874 = vunpack.c.l.b16 %v598
    %v875 = vunpack.c.h.b16 %v598
    %v876 = vunpack.c.l.b16 %v599
    %v877 = vunpack.c.h.b16 %v599
    %v878 = vunpack.c.l.b16 %v600
    %v879 = vunpack.c.h.b16 %v600
    %v880 = vunpack.c.l.b16 %v601
    %v881 = vunpack.c.h.b16 %v601
    %v882 = vunpack.c.l.b16 %v602
    %v883 = vunpack.c.h.b16 %v602
    %v884 = vunpack.c.l.b16 %v603
    %v885 = vunpack.c.h.b16 %v603
    %v886 = vunpack.c.l.b16 %v604
    %v887 = vunpack.c.h.b16 %v604
    %v888 = vunpack.c.l.b16 %v605
    %v889 = vunpack.c.h.b16 %v605
    %v890 = vunpack.c.l.b16 %v606
    %v891 = vunpack.c.h.b16 %v606
    %v892 = vunpack.c.l.b16 %v607
    %v893 = vunpack.c.h.b16 %v607
    %v894 = vunpack.c.l.b16 %v608
    %v895 = vunpack.c.h.b16 %v608
    %v896 = vunpack.c.l.b16 %v609
    %v897 = vunpack.c.h.b16 %v609
    %v898 = vunpack.c.l.b16 %v610
    %v899 = vunpack.c.h.b16 %v610
    %v900 = vunpack.c.l.b16 %v611
    %v901 = vunpack.c.h.b16 %v611
    %v902 = vunpack.c.l.b16 %v612
    %v903 = vunpack.c.h.b16 %v612
    %v904 = vunpack.c.l.b16 %v613
    %v905 = vunpack.c.h.b16 %v613
    %v906 = vunpack.c.l.b16 %v614
    %v907 = vunpack.c.h.b16 %v614
    %v908 = vunpack.c.l.b16 %v615
    %v909 = vunpack.c.h.b16 %v615
    %v910 = vunpack.c.l.b16 %v616
    %v911 = vunpack.c.h.b16 %v616
    %v912 = vunpack.c.l.b16 %v617
    %v913 = vunpack.c.h.b16 %v617
    %v914 = vunpack.c.l.b16 %v618
    %v915 = vunpack.c.h.b16 %v618
    %v916 = vunpack.c.l.b16 %v619
    %v917 = vunpack.c.h.b16 %v619
    %v918 = vunpack.c.l.b16 %v620
    %v919 = vunpack.c.h.b16 %v620
    %v920 = vunpack.c.l.b16 %v621
    %v921 = vunpack.c.h.b16 %v621
    %v922 = vunpack.c.l.b16 %v622
    %v923 = vunpack.c.h.b16 %v622
    %v924 = vunpack.c.l.b16 %v623
    %v925 = vunpack.c.h.b16 %v623
    %v926 = vunpack.c.l.b16 %v624
    %v927 = vunpack.c.h.b16 %v624
    %v928 = vunpack.c.l.b16 %v625
    %v929 = vunpack.c.h.b16 %v625
    %v930 = vunpack.c.l.b16 %v626
    %v931 = vunpack.c.h.b16 %v626
    %v932 = vunpack.c.l.b16 %v627
    %v933 = vunpack.c.h.b16 %v627
    %v934 = vunpack.c.l.b16 %v628
    %v935 = vunpack.c.h.b16 %v628
    %v936 = vunpack.c.l.b16 %v629
    %v937 = vunpack.c.h.b16 %v629
    %v938 = vunpack.c.l.b16 %v630
    %v939 = vunpack.c.h.b16 %v630
    %v940 = vunpack.c.l.b16 %v631
    %v941 = vunpack.c.h.b16 %v631
    %v942 = vunpack.c.l.b16 %v632
    %v943 = vunpack.c.h.b16 %v632
    %v944 = vunpack.c.l.b16 %v633
    %v945 = vunpack.c.h.b16 %v633
    %v946 = vunpack.c.l.b16 %v634
    %v947 = vunpack.c.h.b16 %v634
    %v948 = vunpack.c.l.b16 %v635
    %v949 = vunpack.c.h.b16 %v635
    %v950 = vunpack.c.l.b16 %v636
    %v951 = vunpack.c.h.b16 %v636
    %v952 = vunpack.c.l.b16 %v637
    %v953 = vunpack.c.h.b16 %v637
    %v954 = vunpack.c.l.b16 %v638
    %v955 = vunpack.c.h.b16 %v638
    %v956 = vunpack.c.l.b16 %v639
    %v957 = vunpack.c.h.b16 %v639
    %v958 = vunpack.c.l.b16 %v640
    %v959 = vunpack.c.h.b16 %v640
    %v960 = vunpack.c.l.b16 %v641
    %v961 = vunpack.c.h.b16 %v641
    %v962 = vunpack.c.l.b16 %v642
    %v963 = vunpack.c.h.b16 %v642
    %v964 = vunpack.c.l.b16 %v643
    %v965 = vunpack.c.h.b16 %v643
    %v966 = vunpack.c.l.b16 %v644
    %v967 = vunpack.c.h.b16 %v644
    %v968 = vunpack.c.l.b16 %v645
    %v969 = vunpack.c.h.b16 %v645
    %v970 = vunpack.c.l.b16 %v646
    %v971 = vunpack.c.h.b16 %v646
    %v972 = vunpack.c.l.b16 %v647
    %v973 = vunpack.c.h.b16 %v647
    %v974 = vunpack.c.l.b16 %v648
    %v975 = vunpack.c.h.b16 %v648
    %v976 = vunpack.c.l.b16 %v649
    %v977 = vunpack.c.h.b16 %v649
    %v978 = vunpack.c.l.b16 %v650
    %v979 = vunpack.c.h.b16 %v650
    %v980 = vunpack.c.l.b16 %v651
    %v981 = vunpack.c.h.b16 %v651
    %v982 = vunpack.c.l.b16 %v652
    %v983 = vunpack.c.h.b16 %v652
    %v984 = vunpack.c.l.b16 %v653
    %v985 = vunpack.c.h.b16 %v653
    %v986 = vunpack.c.l.b16 %v654
    %v987 = vunpack.c.h.b16 %v654
    %v988 = vunpack.c.l.b16 %v655
    %v989 = vunpack.c.h.b16 %v655
    %v990 = vunpack.c.l.b16 %v656
    %v991 = vunpack.c.h.b16 %v656
    %v992 = vunpack.c.l.b16 %v657
    %v993 = vunpack.c.h.b16 %v657
    %v994 = vunpack.c.l.b16 %v658
    %v995 = vunpack.c.h.b16 %v658
    %v996 = vunpack.c.l.b16 %v659
    %v997 = vunpack.c.h.b16 %v659
    %v998 = vunpack.c.l.b16 %v660
    %v999 = vunpack.c.h.b16 %v660
    %v1000 = vunpack.c.l.b16 %v661
    %v1001 = vunpack.c.h.b16 %v661
    %v1002 = vunpack.c.l.b16 %v662
    %v1003 = vunpack.c.h.b16 %v662
    %v1004 = vunpack.c.l.b16 %v663
    %v1005 = vunpack.c.h.b16 %v663
    %v1006 = vunpack.c.l.b16 %v664
    %v1007 = vunpack.c.h.b16 %v664
    %v1008 = vunpack.c.l.b16 %v665
    %v1009 = vunpack.c.h.b16 %v665
    %v1010 = vunpack.c.l.b16 %v666
    %v1011 = vunpack.c.h.b16 %v666
    %v1012 = vunpack.c.l.b16 %v667
    %v1013 = vunpack.c.h.b16 %v667
    %v1014 = vunpack.c.l.b16 %v668
    %v1015 = vunpack.c.h.b16 %v668
    %v1016 = vunpack.c.l.b16 %v669
    %v1017 = vunpack.c.h.b16 %v669
    %v1018 = vunpack.c.l.b16 %v670
    %v1019 = vunpack.c.h.b16 %v670
    %v1020 = vunpack.c.l.b16 %v671
    %v1021 = vunpack.c.h.b16 %v671
    %v1022 = vunpack.c.l.b16 %v672
    %v1023 = vunpack.c.h.b16 %v672
    %v1024 = vunpack.c.l.b16 %v673
    %v1025 = vunpack.c.h.b16 %v673
    %v1026 = vunpack.c.l.b16 %v674
    %v1027 = vunpack.c.h.b16 %v674
    %v1028 = vunpack.c.l.b16 %v675
    %v1029 = vunpack.c.h.b16 %v675
    %v1030 = vunpack.c.l.b16 %v676
    %v1031 = vunpack.c.h.b16 %v676
    %v1032 = vunpack.c.l.b16 %v677
    %v1033 = vunpack.c.h.b16 %v677
    %v1034 = vunpack.c.l.b16 %v678
    %v1035 = vunpack.c.h.b16 %v678
    %v1036 = vunpack.c.l.b16 %v679
    %v1037 = vunpack.c.h.b16 %v679
    %v1038 = vunpack.c.l.b16 %v680
    %v1039 = vunpack.c.h.b16 %v680
    %v1040 = vunpack.c.l.b16 %v681
    %v1041 = vunpack.c.h.b16 %v681
    %v1042 = vunpack.c.l.b16 %v682
    %v1043 = vunpack.c.h.b16 %v682
    %v1044 = vunpack.c.l.b16 %v683
    %v1045 = vunpack.c.h.b16 %v683
    %v1046 = vunpack.c.l.b16 %v684
    %v1047 = vunpack.c.h.b16 %v684
    %v1048 = vunpack.c.l.b16 %v685
    %v1049 = vunpack.c.h.b16 %v685
    %v1050 = vunpack.c.l.b16 %v686
    %v1051 = vunpack.c.h.b16 %v686
    %v1052 = vunpack.c.l.b16 %v687
    %v1053 = vunpack.c.h.b16 %v687
    %v1054 = vunpack.c.l.b16 %v688
    %v1055 = vunpack.c.h.b16 %v688
    %v1056 = vunpack.c.l.b16 %v689
    %v1057 = vunpack.c.h.b16 %v689
    %v1058 = vunpack.c.l.b16 %v690
    %v1059 = vunpack.c.h.b16 %v690
    %v1060 = vunpack.c.l.b16 %v691
    %v1061 = vunpack.c.h.b16 %v691
    %v1062 = vunpack.c.l.b16 %v692
    %v1063 = vunpack.c.h.b16 %v692
    %v1064 = vunpack.c.l.b16 %v693
    %v1065 = vunpack.c.h.b16 %v693
    %v1066 = vunpack.c.l.b16 %v694
    %v1067 = vunpack.c.h.b16 %v694
    %v1068 = vunpack.c.l.b16 %v695
    %v1069 = vunpack.c.h.b16 %v695
    %v1070 = vunpack.c.l.b16 %v696
    %v1071 = vunpack.c.h.b16 %v696
    %v1072 = vunpack.c.l.b16 %v697
    %v1073 = vunpack.c.h.b16 %v697
    %v1074 = vunpack.c.l.b16 %v698
    %v1075 = vunpack.c.h.b16 %v698
    %v1076 = vunpack.c.l.b16 %v699
    %v1077 = vunpack.c.h.b16 %v699
    %v1078 = vunpack.c.l.b16 %v700
    %v1079 = vunpack.c.h.b16 %v700
    %v1080 = vunpack.c.l.b16 %v701
    %v1081 = vunpack.c.h.b16 %v701
    %v1082 = vunpack.c.l.b16 %v702
    %v1083 = vunpack.c.h.b16 %v702
    %v1084 = vunpack.c.l.b16 %v703
    %v1085 = vunpack.c.h.b16 %v703
    %v1086 = vunpack.c.l.b16 %v704
    %v1087 = vunpack.c.h.b16 %v704
    %v1088 = vunpack.c.l.b16 %v705
    %v1089 = vunpack.c.h.b16 %v705
    %v1090 = vunpack.c.l.b16 %v706
    %v1091 = vunpack.c.h.b16 %v706
    %v1092 = vunpack.c.l.b16 %v707
    %v1093 = vunpack.c.h.b16 %v707
    %v1094 = vunpack.c.l.b16 %v708
    %v1095 = vunpack.c.h.b16 %v708
    %v1096 = vunpack.c.l.b16 %v709
    %v1097 = vunpack.c.h.b16 %v709
    %v1098 = vunpack.c.l.b16 %v710
    %v1099 = vunpack.c.h.b16 %v710
    %v1100 = vunpack.c.l.b16 %v711
    %v1101 = vunpack.c.h.b16 %v711
    %v1102 = vunpack.c.l.b16 %v712
    %v1103 = vunpack.c.h.b16 %v712
    %v1104 = vunpack.c.l.b16 %v713
    %v1105 = vunpack.c.h.b16 %v713
    %v1106 = vunpack.c.l.b16 %v714
    %v1107 = vunpack.c.h.b16 %v714
    %v1108 = vunpack.c.l.b16 %v715
    %v1109 = vunpack.c.h.b16 %v715
    %v1110 = vpack.c.b16 %v858, %v854
    %v1111 = vpack.c.b16 %v859, %v855
    %v1112 = vpack.c.b16 %v860, %v856
    %v1113 = vpack.c.b16 %v861, %v857
    %v1114 = vpack.c.b16 %v866, %v862
    %v1115 = vpack.c.b16 %v867, %v863
    %v1116 = vpack.c.b16 %v868, %v864
    %v1117 = vpack.c.b16 %v869, %v865
    %v1118 = vpack.c.b16 %v874, %v870
    %v1119 = vpack.c.b16 %v875, %v871
    %v1120 = vpack.c.b16 %v876, %v872
    %v1121 = vpack.c.b16 %v877, %v873
    %v1122 = vpack.c.b16 %v882, %v878
    %v1123 = vpack.c.b16 %v883, %v879
    %v1124 = vpack.c.b16 %v884, %v880
    %v1125 = vpack.c.b16 %v885, %v881
    %v1126 = vpack.c.b16 %v890, %v886
    %v1127 = vpack.c.b16 %v891, %v887
    %v1128 = vpack.c.b16 %v892, %v888
    %v1129 = vpack.c.b16 %v893, %v889
    %v1130 = vpack.c.b16 %v898, %v894
    %v1131 = vpack.c.b16 %v899, %v895
    %v1132 = vpack.c.b16 %v900, %v896
    %v1133 = vpack.c.b16 %v901, %v897
    %v1134 = vpack.c.b16 %v906, %v902
    %v1135 = vpack.c.b16 %v907, %v903
    %v1136 = vpack.c.b16 %v908, %v904
    %v1137 = vpack.c.b16 %v909, %v905
    %v1138 = vpack.c.b16 %v914, %v910
    %v1139 = vpack.c.b16 %v915, %v911
    %v1140 = vpack.c.b16 %v916, %v912
    %v1141 = vpack.c.b16 %v917, %v913
    %v1142 = vpack.c.b16 %v922, %v918
    %v1143 = vpack.c.b16 %v923, %v919
    %v1144 = vpack.c.b16 %v924, %v920
    %v1145 = vpack.c.b16 %v925, %v921
    %v1146 = vpack.c.b16 %v930, %v926
    %v1147 = vpack.c.b16 %v931, %v927
    %v1148 = vpack.c.b16 %v932, %v928
    %v1149 = vpack.c.b16 %v933, %v929
    %v1150 = vpack.c.b16 %v938, %v934
    %v1151 = vpack.c.b16 %v939, %v935
    %v1152 = vpack.c.b16 %v940, %v936
    %v1153 = vpack.c.b16 %v941, %v937
    %v1154 = vpack.c.b16 %v946, %v942
    %v1155 = vpack.c.b16 %v947, %v943
    %v1156 = vpack.c.b16 %v948, %v944
    %v1157 = vpack.c.b16 %v949, %v945
    %v1158 = vpack.c.b16 %v954, %v950
    %v1159 = vpack.c.b16 %v955, %v951
    %v1160 = vpack.c.b16 %v956, %v952
    %v1161 = vpack.c.b16 %v957, %v953
    %v1162 = vpack.c.b16 %v962, %v958
    %v1163 = vpack.c.b16 %v963, %v959
    %v1164 = vpack.c.b16 %v964, %v960
    %v1165 = vpack.c.b16 %v965, %v961
    %v1166 = vpack.c.b16 %v970, %v966
    %v1167 = vpack.c.b16 %v971, %v967
    %v1168 = vpack.c.b16 %v972, %v968
    %v1169 = vpack.c.b16 %v973, %v969
    %v1170 = vpack.c.b16 %v978, %v974
    %v1171 = vpack.c.b16 %v979, %v975
    %v1172 = vpack.c.b16 %v980, %v976
    %v1173 = vpack.c.b16 %v981, %v977
    %v1174 = vpack.c.b16 %v986, %v982
    %v1175 = vpack.c.b16 %v987, %v983
    %v1176 = vpack.c.b16 %v988, %v984
    %v1177 = vpack.c.b16 %v989, %v985
    %v1178 = vpack.c.b16 %v994, %v990
    %v1179 = vpack.c.b16 %v995, %v991
    %v1180 = vpack.c.b16 %v996, %v992
    %v1181 = vpack.c.b16 %v997, %v993
    %v1182 = vpack.c.b16 %v1002, %v998
    %v1183 = vpack.c.b16 %v1003, %v999
    %v1184 = vpack.c.b16 %v1004, %v1000
    %v1185 = vpack.c.b16 %v1005, %v1001
    %v1186 = vpack.c.b16 %v1010, %v1006
    %v1187 = vpack.c.b16 %v1011, %v1007
    %v1188 = vpack.c.b16 %v1012, %v1008
    %v1189 = vpack.c.b16 %v1013, %v1009
    %v1190 = vpack.c.b16 %v1018, %v1014
    %v1191 = vpack.c.b16 %v1019, %v1015
    %v1192 = vpack.c.b16 %v1020, %v1016
    %v1193 = vpack.c.b16 %v1021, %v1017
    %v1194 = vpack.c.b16 %v1026, %v1022
    %v1195 = vpack.c.b16 %v1027, %v1023
    %v1196 = vpack.c.b16 %v1028, %v1024
    %v1197 = vpack.c.b16 %v1029, %v1025
    %v1198 = vpack.c.b16 %v1034, %v1030
    %v1199 = vpack.c.b16 %v1035, %v1031
    %v1200 = vpack.c.b16 %v1036, %v1032
    %v1201 = vpack.c.b16 %v1037, %v1033
    %v1202 = vpack.c.b16 %v1042, %v1038
    %v1203 = vpack.c.b16 %v1043, %v1039
    %v1204 = vpack.c.b16 %v1044, %v1040
    %v1205 = vpack.c.b16 %v1045, %v1041
    %v1206 = vpack.c.b16 %v1050, %v1046
    %v1207 = vpack.c.b16 %v1051, %v1047
    %v1208 = vpack.c.b16 %v1052, %v1048
    %v1209 = vpack.c.b16 %v1053, %v1049
    %v1210 = vpack.c.b16 %v1058, %v1054
    %v1211 = vpack.c.b16 %v1059, %v1055
    %v1212 = vpack.c.b16 %v1060, %v1056
    %v1213 = vpack.c.b16 %v1061, %v1057
    %v1214 = vpack.c.b16 %v1066, %v1062
    %v1215 = vpack.c.b16 %v1067, %v1063
    %v1216 = vpack.c.b16 %v1068, %v1064
    %v1217 = vpack.c.b16 %v1069, %v1065
    %v1218 = vpack.c.b16 %v1074, %v1070
    %v1219 = vpack.c.b16 %v1075, %v1071
    %v1220 = vpack.c.b16 %v1076, %v1072
    %v1221 = vpack.c.b16 %v1077, %v1073
    %v1222 = vpack.c.b16 %v1082, %v1078
    %v1223 = vpack.c.b16 %v1083, %v1079
    %v1224 = vpack.c.b16 %v1084, %v1080
    %v1225 = vpack.c.b16 %v1085, %v1081
    %v1226 = vpack.c.b16 %v1090, %v1086
    %v1227 = vpack.c.b16 %v1091, %v1087
    %v1228 = vpack.c.b16 %v1092, %v1088
    %v1229 = vpack.c.b16 %v1093, %v1089
    %v1230 = vpack.c.b16 %v1098, %v1094
    %v1231 = vpack.c.b16 %v1099, %v1095
    %v1232 = vpack.c.b16 %v1100, %v1096
    %v1233 = vpack.c.b16 %v1101, %v1097
    %v1234 = vpack.c.b16 %v1106, %v1102
    %v1235 = vpack.c.b16 %v1107, %v1103
    %v1236 = vpack.c.b16 %v1108, %v1104
    %v1237 = vpack.c.b16 %v1109, %v1105
    %1366 = vmatpush.bf16.msra.mxu0 %v1138
    %1367 = vmatpush.bf16.msra.mxu0 %v1134
    %1368 = vmatpush.bf16.msra.mxu0 %v1130
    %1369 = vmatpush.bf16.msra.mxu0 %v1126
    %1370 = vmatpush.bf16.msra.mxu0 %v1122
    %1371 = vmatpush.bf16.msra.mxu0 %v1118
    %1372 = vmatpush.bf16.msra.mxu0 %v1114
    %1373 = vmatpush.bf16.msra.mxu0 %v1110
    %1374 = vmatmul.bf16.gmra.mxu0 %v584
    %v1375 = vpop.f32.mrf.mxu0
    %v1376 = vadd.f32 %v718, %v1375
    %v1377 = vpop.f32.mrf.mxu0
    %v1378 = vadd.f32 %v718, %v1377
    %1379 = vdwg.mxu0
    %1380 = vmatpush.bf16.msra.mxu0 %v1170
    %1381 = vmatpush.bf16.msra.mxu0 %v1166
    %1382 = vmatpush.bf16.msra.mxu0 %v1162
    %1383 = vmatpush.bf16.msra.mxu0 %v1158
    %1384 = vmatpush.bf16.msra.mxu0 %v1154
    %1385 = vmatpush.bf16.msra.mxu0 %v1150
    %1386 = vmatpush.bf16.msra.mxu0 %v1146
    %1387 = vmatpush.bf16.msra.mxu0 %v1142
    %1388 = vmatmul.bf16.gmra.mxu0 %v585
    %v1389 = vpop.f32.mrf.mxu0
    %v1390 = vadd.f32 %v1376, %v1389
    %v1391 = vpop.f32.mrf.mxu0
    %v1392 = vadd.f32 %v1378, %v1391
    %1393 = vdwg.mxu0
    %1394 = vmatpush.bf16.msra.mxu0 %v1202
    %1395 = vmatpush.bf16.msra.mxu0 %v1198
    %1396 = vmatpush.bf16.msra.mxu0 %v1194
    %1397 = vmatpush.bf16.msra.mxu0 %v1190
    %1398 = vmatpush.bf16.msra.mxu0 %v1186
    %1399 = vmatpush.bf16.msra.mxu0 %v1182
    %1400 = vmatpush.bf16.msra.mxu0 %v1178
    %1401 = vmatpush.bf16.msra.mxu0 %v1174
    %1402 = vmatmul.bf16.gmra.mxu0 %v586
    %v1403 = vpop.f32.mrf.mxu0
    %v1404 = vadd.f32 %v1390, %v1403
    %v1405 = vpop.f32.mrf.mxu0
    %v1406 = vadd.f32 %v1392, %v1405
    %1407 = vdwg.mxu0
    %1408 = vmatpush.bf16.msra.mxu0 %v1234
    %1409 = vmatpush.bf16.msra.mxu0 %v1230
    %1410 = vmatpush.bf16.msra.mxu0 %v1226
    %1411 = vmatpush.bf16.msra.mxu0 %v1222
    %1412 = vmatpush.bf16.msra.mxu0 %v1218
    %1413 = vmatpush.bf16.msra.mxu0 %v1214
    %1414 = vmatpush.bf16.msra.mxu0 %v1210
    %1415 = vmatpush.bf16.msra.mxu0 %v1206
    %1416 = vmatmul.bf16.gmra.mxu0 %v587
    %v1417 = vpop.f32.mrf.mxu0
    %v1418 = vadd.f32 %v1404, %v1417
    %v1419 = vpop.f32.mrf.mxu0
    %v1420 = vadd.f32 %v1406, %v1419
    %1421 = vdwg.mxu0
    %1422 = vmatpush.bf16.msra.mxu0 %v1139
    %1423 = vmatpush.bf16.msra.mxu0 %v1135
    %1424 = vmatpush.bf16.msra.mxu0 %v1131
    %1425 = vmatpush.bf16.msra.mxu0 %v1127
    %1426 = vmatpush.bf16.msra.mxu0 %v1123
    %1427 = vmatpush.bf16.msra.mxu0 %v1119
    %1428 = vmatpush.bf16.msra.mxu0 %v1115
    %1429 = vmatpush.bf16.msra.mxu0 %v1111
    %1430 = vmatmul.bf16.gmra.mxu0 %v584
    %v1431 = vpop.f32.mrf.mxu0
    %v1432 = vadd.f32 %v719, %v1431
    %v1433 = vpop.f32.mrf.mxu0
    %v1434 = vadd.f32 %v719, %v1433
    %1435 = vdwg.mxu0
    %1436 = vmatpush.bf16.msra.mxu0 %v1171
    %1437 = vmatpush.bf16.msra.mxu0 %v1167
    %1438 = vmatpush.bf16.msra.mxu0 %v1163
    %1439 = vmatpush.bf16.msra.mxu0 %v1159
    %1440 = vmatpush.bf16.msra.mxu0 %v1155
    %1441 = vmatpush.bf16.msra.mxu0 %v1151
    %1442 = vmatpush.bf16.msra.mxu0 %v1147
    %1443 = vmatpush.bf16.msra.mxu0 %v1143
    %1444 = vmatmul.bf16.gmra.mxu0 %v585
    %v1445 = vpop.f32.mrf.mxu0
    %v1446 = vadd.f32 %v1432, %v1445
    %v1447 = vpop.f32.mrf.mxu0
    %v1448 = vadd.f32 %v1434, %v1447
    %1449 = vdwg.mxu0
    %1450 = vmatpush.bf16.msra.mxu0 %v1203
    %1451 = vmatpush.bf16.msra.mxu0 %v1199
    %1452 = vmatpush.bf16.msra.mxu0 %v1195
    %1453 = vmatpush.bf16.msra.mxu0 %v1191
    %1454 = vmatpush.bf16.msra.mxu0 %v1187
    %1455 = vmatpush.bf16.msra.mxu0 %v1183
    %1456 = vmatpush.bf16.msra.mxu0 %v1179
    %1457 = vmatpush.bf16.msra.mxu0 %v1175
    %1458 = vmatmul.bf16.gmra.mxu0 %v586
    %v1459 = vpop.f32.mrf.mxu0
    %v1460 = vadd.f32 %v1446, %v1459
    %v1461 = vpop.f32.mrf.mxu0
    %v1462 = vadd.f32 %v1448, %v1461
    %1463 = vdwg.mxu0
    %1464 = vmatpush.bf16.msra.mxu0 %v1235
    %1465 = vmatpush.bf16.msra.mxu0 %v1231
    %1466 = vmatpush.bf16.msra.mxu0 %v1227
    %1467 = vmatpush.bf16.msra.mxu0 %v1223
    %1468 = vmatpush.bf16.msra.mxu0 %v1219
    %1469 = vmatpush.bf16.msra.mxu0 %v1215
    %1470 = vmatpush.bf16.msra.mxu0 %v1211
    %1471 = vmatpush.bf16.msra.mxu0 %v1207
    %1472 = vmatmul.bf16.gmra.mxu0 %v587
    %v1473 = vpop.f32.mrf.mxu0
    %v1474 = vadd.f32 %v1460, %v1473
    %v1475 = vpop.f32.mrf.mxu0
    %v1476 = vadd.f32 %v1462, %v1475
    %1477 = vdwg.mxu0
    %1478 = vmatpush.bf16.msra.mxu0 %v1140
    %1479 = vmatpush.bf16.msra.mxu0 %v1136
    %1480 = vmatpush.bf16.msra.mxu0 %v1132
    %1481 = vmatpush.bf16.msra.mxu0 %v1128
    %1482 = vmatpush.bf16.msra.mxu0 %v1124
    %1483 = vmatpush.bf16.msra.mxu0 %v1120
    %1484 = vmatpush.bf16.msra.mxu0 %v1116
    %1485 = vmatpush.bf16.msra.mxu0 %v1112
    %1486 = vmatmul.bf16.gmra.mxu0 %v584
    %v1487 = vpop.f32.mrf.mxu0
    %v1488 = vadd.f32 %v720, %v1487
    %v1489 = vpop.f32.mrf.mxu0
    %v1490 = vadd.f32 %v720, %v1489
    %1491 = vdwg.mxu0
    %1492 = vmatpush.bf16.msra.mxu0 %v1172
    %1493 = vmatpush.bf16.msra.mxu0 %v1168
    %1494 = vmatpush.bf16.msra.mxu0 %v1164
    %1495 = vmatpush.bf16.msra.mxu0 %v1160
    %1496 = vmatpush.bf16.msra.mxu0 %v1156
    %1497 = vmatpush.bf16.msra.mxu0 %v1152
    %1498 = vmatpush.bf16.msra.mxu0 %v1148
    %1499 = vmatpush.bf16.msra.mxu0 %v1144
    %1500 = vmatmul.bf16.gmra.mxu0 %v585
    %v1501 = vpop.f32.mrf.mxu0
    %v1502 = vadd.f32 %v1488, %v1501
    %v1503 = vpop.f32.mrf.mxu0
    %v1504 = vadd.f32 %v1490, %v1503
    %1505 = vdwg.mxu0
    %1506 = vmatpush.bf16.msra.mxu0 %v1204
    %1507 = vmatpush.bf16.msra.mxu0 %v1200
    %1508 = vmatpush.bf16.msra.mxu0 %v1196
    %1509 = vmatpush.bf16.msra.mxu0 %v1192
    %1510 = vmatpush.bf16.msra.mxu0 %v1188
    %1511 = vmatpush.bf16.msra.mxu0 %v1184
    %1512 = vmatpush.bf16.msra.mxu0 %v1180
    %1513 = vmatpush.bf16.msra.mxu0 %v1176
    %1514 = vmatmul.bf16.gmra.mxu0 %v586
    %v1515 = vpop.f32.mrf.mxu0
    %v1516 = vadd.f32 %v1502, %v1515
    %v1517 = vpop.f32.mrf.mxu0
    %v1518 = vadd.f32 %v1504, %v1517
    %1519 = vdwg.mxu0
    %1520 = vmatpush.bf16.msra.mxu0 %v1236
    %1521 = vmatpush.bf16.msra.mxu0 %v1232
    %1522 = vmatpush.bf16.msra.mxu0 %v1228
    %1523 = vmatpush.bf16.msra.mxu0 %v1224
    %1524 = vmatpush.bf16.msra.mxu0 %v1220
    %1525 = vmatpush.bf16.msra.mxu0 %v1216
    %1526 = vmatpush.bf16.msra.mxu0 %v1212
    %1527 = vmatpush.bf16.msra.mxu0 %v1208
    %1528 = vmatmul.bf16.gmra.mxu0 %v587
    %v1529 = vpop.f32.mrf.mxu0
    %v1530 = vadd.f32 %v1516, %v1529
    %v1531 = vpop.f32.mrf.mxu0
    %v1532 = vadd.f32 %v1518, %v1531
    %1533 = vdwg.mxu0
    %1534 = vmatpush.bf16.msra.mxu0 %v1141
    %1535 = vmatpush.bf16.msra.mxu0 %v1137
    %1536 = vmatpush.bf16.msra.mxu0 %v1133
    %1537 = vmatpush.bf16.msra.mxu0 %v1129
    %1538 = vmatpush.bf16.msra.mxu0 %v1125
    %1539 = vmatpush.bf16.msra.mxu0 %v1121
    %1540 = vmatpush.bf16.msra.mxu0 %v1117
    %1541 = vmatpush.bf16.msra.mxu0 %v1113
    %1542 = vmatmul.bf16.gmra.mxu0 %v584
    %v1543 = vpop.f32.mrf.mxu0
    %v1544 = vadd.f32 %v721, %v1543
    %v1545 = vpop.f32.mrf.mxu0
    %v1546 = vadd.f32 %v721, %v1545
    %1547 = vdwg.mxu0
    %1548 = vmatpush.bf16.msra.mxu0 %v1173
    %1549 = vmatpush.bf16.msra.mxu0 %v1169
    %1550 = vmatpush.bf16.msra.mxu0 %v1165
    %1551 = vmatpush.bf16.msra.mxu0 %v1161
    %1552 = vmatpush.bf16.msra.mxu0 %v1157
    %1553 = vmatpush.bf16.msra.mxu0 %v1153
    %1554 = vmatpush.bf16.msra.mxu0 %v1149
    %1555 = vmatpush.bf16.msra.mxu0 %v1145
    %1556 = vmatmul.bf16.gmra.mxu0 %v585
    %v1557 = vpop.f32.mrf.mxu0
    %v1558 = vadd.f32 %v1544, %v1557
    %v1559 = vpop.f32.mrf.mxu0
    %v1560 = vadd.f32 %v1546, %v1559
    %1561 = vdwg.mxu0
    %1562 = vmatpush.bf16.msra.mxu0 %v1205
    %1563 = vmatpush.bf16.msra.mxu0 %v1201
    %1564 = vmatpush.bf16.msra.mxu0 %v1197
    %1565 = vmatpush.bf16.msra.mxu0 %v1193
    %1566 = vmatpush.bf16.msra.mxu0 %v1189
    %1567 = vmatpush.bf16.msra.mxu0 %v1185
    %1568 = vmatpush.bf16.msra.mxu0 %v1181
    %1569 = vmatpush.bf16.msra.mxu0 %v1177
    %1570 = vmatmul.bf16.gmra.mxu0 %v586
    %v1571 = vpop.f32.mrf.mxu0
    %v1572 = vadd.f32 %v1558, %v1571
    %v1573 = vpop.f32.mrf.mxu0
    %v1574 = vadd.f32 %v1560, %v1573
    %1575 = vdwg.mxu0
    %1576 = vmatpush.bf16.msra.mxu0 %v1237
    %1577 = vmatpush.bf16.msra.mxu0 %v1233
    %1578 = vmatpush.bf16.msra.mxu0 %v1229
    %1579 = vmatpush.bf16.msra.mxu0 %v1225
    %1580 = vmatpush.bf16.msra.mxu0 %v1221
    %1581 = vmatpush.bf16.msra.mxu0 %v1217
    %1582 = vmatpush.bf16.msra.mxu0 %v1213
    %1583 = vmatpush.bf16.msra.mxu0 %v1209
    %1584 = vmatmul.bf16.gmra.mxu0 %v587
    %v1585 = vpop.f32.mrf.mxu0
    %v1586 = vadd.f32 %v1572, %v1585
    %v1587 = vpop.f32.mrf.mxu0
    %v1588 = vadd.f32 %v1574, %v1587
    %1589 = vdwg.mxu0
    %v1590 = vmax.f32 %v1418, 0.0
    %v1591 = vmax.f32 %v1474, 0.0
    %v1592 = vmax.f32 %v1530, 0.0
    %v1593 = vmax.f32 %v1586, 0.0
    %v1594 = vmax.f32 %v1420, 0.0
    %v1595 = vmax.f32 %v1476, 0.0
    %v1596 = vmax.f32 %v1532, 0.0
    %v1597 = vmax.f32 %v1588, 0.0
    %v1598 = vpack.c.bf16 %v1594, %v1590
    %v1599 = vpack.c.bf16 %v1595, %v1591
    %v1600 = vpack.c.bf16 %v1596, %v1592
    %v1601 = vpack.c.bf16 %v1597, %v1593
    %v1602 = vld [vmem:[#allocation4] sm:$0xf]
    %v1603 = vld [vmem:[#allocation4 + $0x4] sm:$0xf]
    %v1604 = vld [vmem:[#allocation4 + $0x8] sm:$0xf]
    %v1605 = vld [vmem:[#allocation4 + $0xc] sm:$0xf]
    %v1606 = vld [vmem:[#allocation4 + $0x10] sm:$0xf]
    %v1607 = vld [vmem:[#allocation4 + $0x14] sm:$0xf]
    %v1608 = vld [vmem:[#allocation4 + $0x18] sm:$0xf]
    %v1609 = vld [vmem:[#allocation4 + $0x1c] sm:$0xf]
    %v1610 = vld [vmem:[#allocation4 + $0x20] sm:$0xf]
    %v1611 = vld [vmem:[#allocation4 + $0x24] sm:$0xf]
    %v1612 = vld [vmem:[#allocation4 + $0x28] sm:$0xf]
    %v1613 = vld [vmem:[#allocation4 + $0x2c] sm:$0xf]
    %v1614 = vld [vmem:[#allocation4 + $0x30] sm:$0xf]
    %v1615 = vld [vmem:[#allocation4 + $0x34] sm:$0xf]
    %v1616 = vld [vmem:[#allocation4 + $0x38] sm:$0xf]
    %v1617 = vld [vmem:[#allocation4 + $0x3c] sm:$0xf]
    %v1618 = vld [vmem:[#allocation4 + $0x40] sm:$0xf]
    %v1619 = vld [vmem:[#allocation4 + $0x44] sm:$0xf]
    %v1620 = vld [vmem:[#allocation4 + $0x48] sm:$0xf]
    %v1621 = vld [vmem:[#allocation4 + $0x4c] sm:$0xf]
    %v1622 = vld [vmem:[#allocation4 + $0x50] sm:$0xf]
    %v1623 = vld [vmem:[#allocation4 + $0x54] sm:$0xf]
    %v1624 = vld [vmem:[#allocation4 + $0x58] sm:$0xf]
    %v1625 = vld [vmem:[#allocation4 + $0x5c] sm:$0xf]
    %v1626 = vld [vmem:[#allocation4 + $0x60] sm:$0xf]
    %v1627 = vld [vmem:[#allocation4 + $0x64] sm:$0xf]
    %v1628 = vld [vmem:[#allocation4 + $0x68] sm:$0xf]
    %v1629 = vld [vmem:[#allocation4 + $0x6c] sm:$0xf]
    %v1630 = vld [vmem:[#allocation4 + $0x70] sm:$0xf]
    %v1631 = vld [vmem:[#allocation4 + $0x74] sm:$0xf]
    %v1632 = vld [vmem:[#allocation4 + $0x78] sm:$0xf]
    %v1633 = vld [vmem:[#allocation4 + $0x7c] sm:$0xf]
    %v1634 = vld [vmem:[#allocation4 + $0x80] sm:$0xf]
    %v1635 = vld [vmem:[#allocation4 + $0x84] sm:$0xf]
    %v1636 = vld [vmem:[#allocation4 + $0x88] sm:$0xf]
    %v1637 = vld [vmem:[#allocation4 + $0x8c] sm:$0xf]
    %v1638 = vld [vmem:[#allocation4 + $0x90] sm:$0xf]
    %v1639 = vld [vmem:[#allocation4 + $0x94] sm:$0xf]
    %v1640 = vld [vmem:[#allocation4 + $0x98] sm:$0xf]
    %v1641 = vld [vmem:[#allocation4 + $0x9c] sm:$0xf]
    %v1642 = vld [vmem:[#allocation4 + $0xa0] sm:$0xf]
    %v1643 = vld [vmem:[#allocation4 + $0xa4] sm:$0xf]
    %v1644 = vld [vmem:[#allocation4 + $0xa8] sm:$0xf]
    %v1645 = vld [vmem:[#allocation4 + $0xac] sm:$0xf]
    %v1646 = vld [vmem:[#allocation4 + $0xb0] sm:$0xf]
    %v1647 = vld [vmem:[#allocation4 + $0xb4] sm:$0xf]
    %v1648 = vld [vmem:[#allocation4 + $0xb8] sm:$0xf]
    %v1649 = vld [vmem:[#allocation4 + $0xbc] sm:$0xf]
    %v1650 = vld [vmem:[#allocation4 + $0xc0] sm:$0xf]
    %v1651 = vld [vmem:[#allocation4 + $0xc4] sm:$0xf]
    %v1652 = vld [vmem:[#allocation4 + $0xc8] sm:$0xf]
    %v1653 = vld [vmem:[#allocation4 + $0xcc] sm:$0xf]
    %v1654 = vld [vmem:[#allocation4 + $0xd0] sm:$0xf]
    %v1655 = vld [vmem:[#allocation4 + $0xd4] sm:$0xf]
    %v1656 = vld [vmem:[#allocation4 + $0xd8] sm:$0xf]
    %v1657 = vld [vmem:[#allocation4 + $0xdc] sm:$0xf]
    %v1658 = vld [vmem:[#allocation4 + $0xe0] sm:$0xf]
    %v1659 = vld [vmem:[#allocation4 + $0xe4] sm:$0xf]
    %v1660 = vld [vmem:[#allocation4 + $0xe8] sm:$0xf]
    %v1661 = vld [vmem:[#allocation4 + $0xec] sm:$0xf]
    %v1662 = vld [vmem:[#allocation4 + $0xf0] sm:$0xf]
    %v1663 = vld [vmem:[#allocation4 + $0xf4] sm:$0xf]
    %v1664 = vld [vmem:[#allocation4 + $0xf8] sm:$0xf]
    %v1665 = vld [vmem:[#allocation4 + $0xfc] sm:$0xf]
    %v1666 = vld [vmem:[%s6] sm:$0x1]
    %v1668 = vperm.slane %v1666, 0
    %v1734 = vunpack.c.l.b16 %v1602
    %v1735 = vunpack.c.l.b16 %v1603
    %v1736 = vunpack.c.l.b16 %v1604
    %v1737 = vunpack.c.l.b16 %v1605
    %v1738 = vunpack.c.l.b16 %v1606
    %v1739 = vunpack.c.l.b16 %v1607
    %v1740 = vunpack.c.l.b16 %v1608
    %v1741 = vunpack.c.l.b16 %v1609
    %v1742 = vunpack.c.l.b16 %v1610
    %v1743 = vunpack.c.l.b16 %v1611
    %v1744 = vunpack.c.l.b16 %v1612
    %v1745 = vunpack.c.l.b16 %v1613
    %v1746 = vunpack.c.l.b16 %v1614
    %v1747 = vunpack.c.l.b16 %v1615
    %v1748 = vunpack.c.l.b16 %v1616
    %v1749 = vunpack.c.l.b16 %v1617
    %v1750 = vunpack.c.l.b16 %v1618
    %v1751 = vunpack.c.l.b16 %v1619
    %v1752 = vunpack.c.l.b16 %v1620
    %v1753 = vunpack.c.l.b16 %v1621
    %v1754 = vunpack.c.l.b16 %v1622
    %v1755 = vunpack.c.l.b16 %v1623
    %v1756 = vunpack.c.l.b16 %v1624
    %v1757 = vunpack.c.l.b16 %v1625
    %v1758 = vunpack.c.l.b16 %v1626
    %v1759 = vunpack.c.l.b16 %v1627
    %v1760 = vunpack.c.l.b16 %v1628
    %v1761 = vunpack.c.l.b16 %v1629
    %v1762 = vunpack.c.l.b16 %v1630
    %v1763 = vunpack.c.l.b16 %v1631
    %v1764 = vunpack.c.l.b16 %v1632
    %v1765 = vunpack.c.l.b16 %v1633
    %v1766 = vunpack.c.l.b16 %v1634
    %v1767 = vunpack.c.l.b16 %v1635
    %v1768 = vunpack.c.l.b16 %v1636
    %v1769 = vunpack.c.l.b16 %v1637
    %v1770 = vunpack.c.l.b16 %v1638
    %v1771 = vunpack.c.l.b16 %v1639
    %v1772 = vunpack.c.l.b16 %v1640
    %v1773 = vunpack.c.l.b16 %v1641
    %v1774 = vunpack.c.l.b16 %v1642
    %v1775 = vunpack.c.l.b16 %v1643
    %v1776 = vunpack.c.l.b16 %v1644
    %v1777 = vunpack.c.l.b16 %v1645
    %v1778 = vunpack.c.l.b16 %v1646
    %v1779 = vunpack.c.l.b16 %v1647
    %v1780 = vunpack.c.l.b16 %v1648
    %v1781 = vunpack.c.l.b16 %v1649
    %v1782 = vunpack.c.l.b16 %v1650
    %v1783 = vunpack.c.l.b16 %v1651
    %v1784 = vunpack.c.l.b16 %v1652
    %v1785 = vunpack.c.l.b16 %v1653
    %v1786 = vunpack.c.l.b16 %v1654
    %v1787 = vunpack.c.l.b16 %v1655
    %v1788 = vunpack.c.l.b16 %v1656
    %v1789 = vunpack.c.l.b16 %v1657
    %v1790 = vunpack.c.l.b16 %v1658
    %v1791 = vunpack.c.l.b16 %v1659
    %v1792 = vunpack.c.l.b16 %v1660
    %v1793 = vunpack.c.l.b16 %v1661
    %v1794 = vunpack.c.l.b16 %v1662
    %v1795 = vunpack.c.l.b16 %v1663
    %v1796 = vunpack.c.l.b16 %v1664
    %v1797 = vunpack.c.l.b16 %v1665
    %v1798 = vpack.c.b16 %v1735, %v1734
    %v1799 = vpack.c.b16 %v1737, %v1736
    %v1800 = vpack.c.b16 %v1739, %v1738
    %v1801 = vpack.c.b16 %v1741, %v1740
    %v1802 = vpack.c.b16 %v1743, %v1742
    %v1803 = vpack.c.b16 %v1745, %v1744
    %v1804 = vpack.c.b16 %v1747, %v1746
    %v1805 = vpack.c.b16 %v1749, %v1748
    %v1806 = vpack.c.b16 %v1751, %v1750
    %v1807 = vpack.c.b16 %v1753, %v1752
    %v1808 = vpack.c.b16 %v1755, %v1754
    %v1809 = vpack.c.b16 %v1757, %v1756
    %v1810 = vpack.c.b16 %v1759, %v1758
    %v1811 = vpack.c.b16 %v1761, %v1760
    %v1812 = vpack.c.b16 %v1763, %v1762
    %v1813 = vpack.c.b16 %v1765, %v1764
    %v1814 = vpack.c.b16 %v1767, %v1766
    %v1815 = vpack.c.b16 %v1769, %v1768
    %v1816 = vpack.c.b16 %v1771, %v1770
    %v1817 = vpack.c.b16 %v1773, %v1772
    %v1818 = vpack.c.b16 %v1775, %v1774
    %v1819 = vpack.c.b16 %v1777, %v1776
    %v1820 = vpack.c.b16 %v1779, %v1778
    %v1821 = vpack.c.b16 %v1781, %v1780
    %v1822 = vpack.c.b16 %v1783, %v1782
    %v1823 = vpack.c.b16 %v1785, %v1784
    %v1824 = vpack.c.b16 %v1787, %v1786
    %v1825 = vpack.c.b16 %v1789, %v1788
    %v1826 = vpack.c.b16 %v1791, %v1790
    %v1827 = vpack.c.b16 %v1793, %v1792
    %v1828 = vpack.c.b16 %v1795, %v1794
    %v1829 = vpack.c.b16 %v1797, %v1796
    %1862 = vmatpush.bf16.msra.mxu0 %v1805
    %1863 = vmatpush.bf16.msra.mxu0 %v1804
    %1864 = vmatpush.bf16.msra.mxu0 %v1803
    %1865 = vmatpush.bf16.msra.mxu0 %v1802
    %1866 = vmatpush.bf16.msra.mxu0 %v1801
    %1867 = vmatpush.bf16.msra.mxu0 %v1800
    %1868 = vmatpush.bf16.msra.mxu0 %v1799
    %1869 = vmatpush.bf16.msra.mxu0 %v1798
    %1870 = vmatmul.bf16.gmra.mxu0 %v1598
    %v1871 = vpop.f32.mrf.mxu0
    %v1872 = vadd.f32 %v1668, %v1871
    %v1873 = vpop.f32.mrf.mxu0
    %v1874 = vadd.f32 %v1668, %v1873
    %1875 = vdwg.mxu0
    %1876 = vmatpush.bf16.msra.mxu0 %v1813
    %1877 = vmatpush.bf16.msra.mxu0 %v1812
    %1878 = vmatpush.bf16.msra.mxu0 %v1811
    %1879 = vmatpush.bf16.msra.mxu0 %v1810
    %1880 = vmatpush.bf16.msra.mxu0 %v1809
    %1881 = vmatpush.bf16.msra.mxu0 %v1808
    %1882 = vmatpush.bf16.msra.mxu0 %v1807
    %1883 = vmatpush.bf16.msra.mxu0 %v1806
    %1884 = vmatmul.bf16.gmra.mxu0 %v1599
    %v1885 = vpop.f32.mrf.mxu0
    %v1886 = vadd.f32 %v1872, %v1885
    %v1887 = vpop.f32.mrf.mxu0
    %v1888 = vadd.f32 %v1874, %v1887
    %1889 = vdwg.mxu0
    %1890 = vmatpush.bf16.msra.mxu0 %v1821
    %1891 = vmatpush.bf16.msra.mxu0 %v1820
    %1892 = vmatpush.bf16.msra.mxu0 %v1819
    %1893 = vmatpush.bf16.msra.mxu0 %v1818
    %1894 = vmatpush.bf16.msra.mxu0 %v1817
    %1895 = vmatpush.bf16.msra.mxu0 %v1816
    %1896 = vmatpush.bf16.msra.mxu0 %v1815
    %1897 = vmatpush.bf16.msra.mxu0 %v1814
    %1898 = vmatmul.bf16.gmra.mxu0 %v1600
    %v1899 = vpop.f32.mrf.mxu0
    %v1900 = vadd.f32 %v1886, %v1899
    %v1901 = vpop.f32.mrf.mxu0
    %v1902 = vadd.f32 %v1888, %v1901
    %1903 = vdwg.mxu0
    %1904 = vmatpush.bf16.msra.mxu0 %v1829
    %1905 = vmatpush.bf16.msra.mxu0 %v1828
    %1906 = vmatpush.bf16.msra.mxu0 %v1827
    %1907 = vmatpush.bf16.msra.mxu0 %v1826
    %1908 = vmatpush.bf16.msra.mxu0 %v1825
    %1909 = vmatpush.bf16.msra.mxu0 %v1824
    %1910 = vmatpush.bf16.msra.mxu0 %v1823
    %1911 = vmatpush.bf16.msra.mxu0 %v1822
    %1912 = vmatmul.bf16.gmra.mxu0 %v1601
    %v1913 = vpop.f32.mrf.mxu0
    %v1914 = vadd.f32 %v1900, %v1913
    %v1915 = vpop.f32.mrf.mxu0
    %v1916 = vadd.f32 %v1902, %v1915
    %1917 = vdwg.mxu0
    %1918 = vst [vmem:[%s7] sm:$0xff] %v1914
    %1919 = vst [vmem:[%s7 + $0x8] sm:$0xff] %v1916
    // Predicated region
    $region38: #{mlp_forward.1} parent=1 // pred_check
      _
    $region39: #{mlp_forward.1} parent=1 // pred_check_branch
      %1921 = sbr.rel (0) target = $region41
    $region40: #{mlp_forward.1} parent=1 // pred_region
      _
    $region41: #{mlp_forward.1} parent=1 // pred_fallthru
      _
    // Predicated region
    $region42: #{mlp_forward.1} parent=1 // pred_check
      _
    $region43: #{mlp_forward.1} parent=1 // pred_check_branch
      %1923 = sbr.rel (0) target = $region45
    $region44: #{mlp_forward.1} parent=1 // pred_region
      _
    $region45: #{mlp_forward.1} parent=1 // pred_fallthru
      _
    %1924 = vsyncpa [#allocation3], 1
    %1925 = vsyncpa [#allocation5], 1

</llo_original>
